<compile_context>
chip_gen: v5e
topology: v5e:2x2
jax: 0.10.0
libtpu: 0.0.40
codegen_flags: <defaults>
</compile_context>

<pallas_src>
import jax
import jax.numpy as jnp
from jax.experimental import pallas as pl
from jax.experimental.pallas import tpu as pltpu


def _iwt_kernel(x_ref, o_ref):
    # x_ref: (1, 4, TC, H, W)  -- the 4 sub-bands of TC output channels.
    # o_ref: (1, TC, H, 4W)    -- row i = [h[2i, :], h[2i+1, :]].
    x1 = x_ref[0, 0]
    x2 = x_ref[0, 1]
    x3 = x_ref[0, 2]
    x4 = x_ref[0, 3]

    # Butterfly (the *0.5 is the reference's /2).
    s = (x1 + x4) * 0.5
    t = (x2 + x3) * 0.5
    u = (x1 - x4) * 0.5
    v = (x2 - x3) * 0.5

    a = s - t   # h[2i,   2j]
    b = u - v   # h[2i+1, 2j]
    c = u + v   # h[2i,   2j+1]
    d = s + t   # h[2i+1, 2j+1]

    tc, h, w = a.shape
    # Lane-interleave (a, c) -> even output rows, (b, d) -> odd output rows.
    even = jnp.stack([a, c], axis=-1).reshape(tc, h, 2 * w)   # h[2i,   :]
    odd = jnp.stack([b, d], axis=-1).reshape(tc, h, 2 * w)    # h[2i+1, :]
    o_ref[0, :, :, : 2 * w] = even
    o_ref[0, :, :, 2 * w:] = odd


def _pick_channel_block(C, H, W, itemsize=4, target_bytes=2 << 20):
    """Largest divisor of C whose per-step input tile is ~<= target_bytes."""
    per_channel = 4 * H * W * itemsize     # input bytes per output channel
    tc = max(1, min(C, target_bytes // per_channel))
    while C % tc:
        tc -= 1
    return int(tc)


def iwt(x):
    """Pallas IWT: (B, 4C, H, W) -> (B, C, 2H, 2W), float32."""
    x = x.astype(jnp.float32)
    B, C4, H, W = x.shape
    assert C4 % 4 == 0, "channel dim must be a multiple of 4"
    C = C4 // 4

    # Free view: sub-band k of output channel c is xr[:, k, c].
    xr = x.reshape(B, 4, C, H, W)

    TC = _pick_channel_block(C, H, W)
    grid = (B, C // TC)
    # TODO(synk): for very small B*C with large H on v7x, add an H-tile grid
    # axis so both TensorCores stay busy; not needed at these demo shapes.

    out = pl.pallas_call(
        _iwt_kernel,
        out_shape=jax.ShapeDtypeStruct((B, C, H, 4 * W), jnp.float32),
        grid=grid,
        in_specs=[pl.BlockSpec((1, 4, TC, H, W),
                               lambda bi, ci: (bi, 0, ci, 0, 0))],
        out_specs=pl.BlockSpec((1, TC, H, 4 * W),
                               lambda bi, ci: (bi, ci, 0, 0)),
        compiler_params=pltpu.CompilerParams(
            dimension_semantics=("parallel", "parallel"),
            vmem_limit_bytes=32 * 1024 * 1024),
    )(xr)

    # (B, C, H, 4W) and (B, C, 2H, 2W) are bit-identical in row-major order.
    return out.reshape(B, C, 2 * H, 2 * W)


def iwt_ref(x):
    """Pure-JAX reference mirroring the PyTorch iwt_init."""
    B, C4, H, W = x.shape
    C = C4 // 4
    x1 = x[:, 0 * C:1 * C] / 2
    x2 = x[:, 1 * C:2 * C] / 2
    x3 = x[:, 2 * C:3 * C] / 2
    x4 = x[:, 3 * C:4 * C] / 2
    h = jnp.zeros((B, C, 2 * H, 2 * W), jnp.float32)
    h = h.at[:, :, 0::2, 0::2].set(x1 - x2 - x3 + x4)
    h = h.at[:, :, 1::2, 0::2].set(x1 - x2 + x3 - x4)
    h = h.at[:, :, 0::2, 1::2].set(x1 + x2 - x3 - x4)
    h = h.at[:, :, 1::2, 1::2].set(x1 + x2 + x3 + x4)
    return h


if __name__ == "__main__":
    key = jax.random.PRNGKey(0)
    k1, k2 = jax.random.split(key)

    # Minimal config (out_channels = 1): (B, 4C, H, W) = (2, 4, 16, 16).
    x_small = jax.random.normal(k1, (2, 4, 16, 16), dtype=jnp.float32)
    out = jax.block_until_ready(iwt(x_small))
    ref = jax.block_until_ready(iwt_ref(x_small))
    assert out.shape == (2, 1, 32, 32), out.shape
    assert out.dtype == jnp.float32
    assert jnp.allclose(out, ref, atol=1e-5, rtol=1e-5), "mismatch vs reference"

    # Slightly larger case exercising channel blocking + lane-dense stores.
    x_big = jax.random.normal(k2, (2, 16, 32, 32), dtype=jnp.float32)
    out2 = jax.block_until_ready(iwt(x_big))
    ref2 = jax.block_until_ready(iwt_ref(x_big))
    assert out2.shape == (2, 4, 64, 64), out2.shape
    assert jnp.allclose(out2, ref2, atol=1e-5, rtol=1e-5), "mismatch vs reference"

    print("KERNEL_OK")
</pallas_src>

<mosaic_0001>
module attributes {stable_mosaic.version = 11 : i64} {
  func.func @_iwt_kernel(%arg0: i32, %arg1: i32, %arg2: memref<1x4x1x16x16xf32, #tpu.memory_space<vmem>>, %arg3: memref<1x1x16x64xf32, #tpu.memory_space<vmem>>) attributes {dimension_semantics = [#tpu.dimension_semantics<parallel>, #tpu.dimension_semantics<parallel>], iteration_bounds = array<i64: 2, 1>, scalar_prefetch = 0 : i64, scratch_operands = 0 : i64, tpu.core_type = #tpu.core_type<tc>, window_params = [{transform_indices = @transform_0, window_bounds = array<i64: 1, 4, 1, 16, 16>}, {transform_indices = @transform_1, window_bounds = array<i64: 1, 1, 16, 64>}]} {
    %c0 = arith.constant 0 : index
    %c0_0 = arith.constant 0 : index
    %c0_1 = arith.constant 0 : index
    %c0_2 = arith.constant 0 : index
    %c0_3 = arith.constant 0 : index
    %0 = vector.load %arg2[%c0, %c0_0, %c0_1, %c0_2, %c0_3] : memref<1x4x1x16x16xf32, #tpu.memory_space<vmem>>, vector<1x1x1x16x16xf32>
    %1 = vector.shape_cast %0 : vector<1x1x1x16x16xf32> to vector<1x16x16xf32>
    %c0_4 = arith.constant 0 : index
    %c1 = arith.constant 1 : index
    %c0_5 = arith.constant 0 : index
    %c0_6 = arith.constant 0 : index
    %c0_7 = arith.constant 0 : index
    %2 = vector.load %arg2[%c0_4, %c1, %c0_5, %c0_6, %c0_7] : memref<1x4x1x16x16xf32, #tpu.memory_space<vmem>>, vector<1x1x1x16x16xf32>
    %3 = vector.shape_cast %2 : vector<1x1x1x16x16xf32> to vector<1x16x16xf32>
    %c0_8 = arith.constant 0 : index
    %c2 = arith.constant 2 : index
    %c0_9 = arith.constant 0 : index
    %c0_10 = arith.constant 0 : index
    %c0_11 = arith.constant 0 : index
    %4 = vector.load %arg2[%c0_8, %c2, %c0_9, %c0_10, %c0_11] : memref<1x4x1x16x16xf32, #tpu.memory_space<vmem>>, vector<1x1x1x16x16xf32>
    %5 = vector.shape_cast %4 : vector<1x1x1x16x16xf32> to vector<1x16x16xf32>
    %c0_12 = arith.constant 0 : index
    %c3 = arith.constant 3 : index
    %c0_13 = arith.constant 0 : index
    %c0_14 = arith.constant 0 : index
    %c0_15 = arith.constant 0 : index
    %6 = vector.load %arg2[%c0_12, %c3, %c0_13, %c0_14, %c0_15] : memref<1x4x1x16x16xf32, #tpu.memory_space<vmem>>, vector<1x1x1x16x16xf32>
    %7 = vector.shape_cast %6 : vector<1x1x1x16x16xf32> to vector<1x16x16xf32>
    %8 = arith.addf %1, %7 : vector<1x16x16xf32>
    %cst = arith.constant 5.000000e-01 : f32
    %9 = vector.broadcast %cst : f32 to vector<1x16x16xf32>
    %10 = arith.mulf %8, %9 : vector<1x16x16xf32>
    %11 = arith.addf %3, %5 : vector<1x16x16xf32>
    %cst_16 = arith.constant 5.000000e-01 : f32
    %12 = vector.broadcast %cst_16 : f32 to vector<1x16x16xf32>
    %13 = arith.mulf %11, %12 : vector<1x16x16xf32>
    %14 = arith.subf %1, %7 : vector<1x16x16xf32>
    %cst_17 = arith.constant 5.000000e-01 : f32
    %15 = vector.broadcast %cst_17 : f32 to vector<1x16x16xf32>
    %16 = arith.mulf %14, %15 : vector<1x16x16xf32>
    %17 = arith.subf %3, %5 : vector<1x16x16xf32>
    %cst_18 = arith.constant 5.000000e-01 : f32
    %18 = vector.broadcast %cst_18 : f32 to vector<1x16x16xf32>
    %19 = arith.mulf %17, %18 : vector<1x16x16xf32>
    %20 = arith.subf %10, %13 : vector<1x16x16xf32>
    %21 = arith.subf %16, %19 : vector<1x16x16xf32>
    %22 = arith.addf %16, %19 : vector<1x16x16xf32>
    %23 = arith.addf %10, %13 : vector<1x16x16xf32>
    %24 = vector.shape_cast %20 : vector<1x16x16xf32> to vector<1x16x16x1xf32>
    %25 = vector.shape_cast %22 : vector<1x16x16xf32> to vector<1x16x16x1xf32>
    %26 = tpu.concatenate %24, %25 in 3 : vector<1x16x16x1xf32>, vector<1x16x16x1xf32> -> vector<1x16x16x2xf32>
    %27 = vector.shape_cast %26 : vector<1x16x16x2xf32> to vector<1x16x32xf32>
    %28 = vector.shape_cast %21 : vector<1x16x16xf32> to vector<1x16x16x1xf32>
    %29 = vector.shape_cast %23 : vector<1x16x16xf32> to vector<1x16x16x1xf32>
    %30 = tpu.concatenate %28, %29 in 3 : vector<1x16x16x1xf32>, vector<1x16x16x1xf32> -> vector<1x16x16x2xf32>
    %31 = vector.shape_cast %30 : vector<1x16x16x2xf32> to vector<1x16x32xf32>
    %c0_19 = arith.constant 0 : index
    %c0_20 = arith.constant 0 : index
    %c0_21 = arith.constant 0 : index
    %c0_22 = arith.constant 0 : index
    %32 = vector.load %arg3[%c0_19, %c0_20, %c0_21, %c0_22] : memref<1x1x16x64xf32, #tpu.memory_space<vmem>>, vector<1x1x16x32xf32>
    %33 = vector.shape_cast %32 : vector<1x1x16x32xf32> to vector<1x16x32xf32>
    %34 = vector.shape_cast %27 : vector<1x16x32xf32> to vector<1x1x16x32xf32>
    tpu.vector_store %arg3[%c0_19, %c0_20, %c0_21, %c0_22], %34 {strides = array<i32>} : memref<1x1x16x64xf32, #tpu.memory_space<vmem>>, vector<1x1x16x32xf32>,
    %c0_23 = arith.constant 0 : index
    %c0_24 = arith.constant 0 : index
    %c0_25 = arith.constant 0 : index
    %c32 = arith.constant 32 : index
    %35 = vector.load %arg3[%c0_23, %c0_24, %c0_25, %c32] : memref<1x1x16x64xf32, #tpu.memory_space<vmem>>, vector<1x1x16x32xf32>
    %36 = vector.shape_cast %35 : vector<1x1x16x32xf32> to vector<1x16x32xf32>
    %37 = vector.shape_cast %31 : vector<1x16x32xf32> to vector<1x1x16x32xf32>
    tpu.vector_store %arg3[%c0_23, %c0_24, %c0_25, %c32], %37 {strides = array<i32>} : memref<1x1x16x64xf32, #tpu.memory_space<vmem>>, vector<1x1x16x32xf32>,
    return
  }
  func.func @transform_0(%arg0: i32, %arg1: i32) -> (i32, i32, i32, i32, i32) {
    %c0_i32 = arith.constant 0 : i32
    %c0_i32_0 = arith.constant 0 : i32
    %c0_i32_1 = arith.constant 0 : i32
    %c0_i32_2 = arith.constant 0 : i32
    return %arg0, %c0_i32, %arg1, %c0_i32_0, %c0_i32_1 : i32, i32, i32, i32, i32
  }
  func.func @transform_1(%arg0: i32, %arg1: i32) -> (i32, i32, i32, i32) {
    %c0_i32 = arith.constant 0 : i32
    %c0_i32_0 = arith.constant 0 : i32
    %c0_i32_1 = arith.constant 0 : i32
    return %arg0, %arg1, %c0_i32, %c0_i32_0 : i32, i32, i32, i32
  }
}

</mosaic_0001>

<llo_original>
// kernel: tpu_custom_call.1
$region0: #{tpu_custom_call.1}
  #allocation0 [shape = 'u32[]', space=smem, size = 0x4, offset = 0x4, fixed_abs, tag = 'smem constant byte address 0x4 - core index']
  #allocation1 [shape = 'u32[72,128]{1,0:T(1,128)}', space=vmem, size = 0x9000, scoped, tag = 'internal scratch']
  %s0 = inlined_call_operand.hbm [shape: f32[2,4,1,16,16], index: 0, kind: input, shape index: {}]
  %s1 = inlined_call_operand.hbm [shape: f32[2,1,16,64], index: 1, kind: output, shape index: {}]
  %s2 = sld [smem:[#allocation0]]
  $region41: #{tpu_custom_call.1} parent=0
    _
  %s4 = ssub.s32 1, %s2
  %s5 = scalar_select 0, %s4, %s2
  $region1: #{tpu_custom_call.1} parent=0
    #allocation2 [shape = 'u8[65536]{0}', space=vmem, size = 0x10000, scoped, tag = 'input window, operand 0']
    #allocation3 [shape = 's32[2]{0}', space=sflag, size = 0x8, scoped, tag = 'scoped memory for tpu_custom_call.1']
    #allocation4 [shape = 's32[2]{0}', space=sflag, size = 0x8, scoped, tag = 'scoped memory for tpu_custom_call.1']
    #allocation5 [shape = 'u8[16384]{0}', space=vmem, size = 0x4000, scoped, tag = 'output window, operand 0']
    %6 = vsyncpa [#allocation3], 0
    %s7 = scalar_lea.sflag [#allocation3], 1
    %8 = vsyncpa %s7, 0
    %9 = vsyncpa [#allocation4], 0
    %s10 = scalar_lea.sflag [#allocation4], 1
    %11 = vsyncpa %s10, 0
    loop: start=0, step=1, limit=4
    $region2: #{tpu_custom_call.1} parent=1 // loop_pre_header
      _
    $region3: #{tpu_custom_call.1} parent=1 // loop_header
      %s13 = sphi 0, %s17
      %p14 = scmp.ge.s32.totalorder %s13, 4
      %s20 = sphi 0, %s32
      %s21 = sphi 0, %s28
      %s22 = sphi 0, %s20
      %s23 = sphi 0, %s21
      %s24 = sphi 0, %s22
      %s25 = sphi 0, %s23
      %s37 = sphi 0, %s39
      %s40 = sphi 0, %s37
      %s41 = sphi 0, %s40
      %s57 = sphi 0, %s41
      %s65 = sphi 0, %s67
      %s68 = sphi 0, %s65
      %s69 = sphi 0, %s68
      %s85 = sphi 0, %s69
    $region4: #{tpu_custom_call.1} parent=1 // loop_header_branch
      %16 = sbr.rel (%p14) target = $region8
    $region5: #{tpu_custom_call.1} parent=1 // loop_body
      %s18 = ssub.s32 %s13, 1
      %s19 = ssub.s32 %s13, 2
      %s26 = sadd.s32 1, %s21
      %p27 = scmp.ge.s32.totalorder %s26, 1
      %s28 = scalar_select %p27, 0, %s26
      %s29 = sadd.s32 1, %s20
      %s30 = scalar_select %p27, %s29, %s20
      %p31 = scmp.ge.s32.totalorder %s30, 2
      %s32 = scalar_select %p31, 0, %s30
      %s33 = ssub.s32 %s20, %s32
      %s34 = ssub.s32 %s21, %s28
      %s35 = sor.u32 %s33, %s34
      %p36 = scmp.eq.s32.totalorder %s35, 0
      %s38 = sadd.s32 %s37, 1
      %s39 = scalar_select %p36, %s37, %s38
      %p42 = pneg %p36
      %p43 = scmp.eq.s32.totalorder %s13, 1
      %p44 = por %p42, %p43
      %p45 = scmp.ne.s32.totalorder %s37, %s40
      %p46 = scmp.eq.s32.totalorder %s13, 0
      %p47 = por %p45, %p46
      %p48 = scmp.ne.s32.totalorder %s37, %s40
      %p49 = scmp.eq.s32.totalorder %s18, 1
      %p50 = por %p48, %p49
      %p51 = scmp.ne.s32.totalorder %s40, %s41
      %p52 = scmp.eq.s32.totalorder %s18, 0
      %p53 = por %p51, %p52
      %p54 = scmp.ne.s32.totalorder %s40, %s41
      %p55 = scmp.eq.s32.totalorder %s19, 1
      %p56 = por %p54, %p55
      %p58 = scmp.ne.s32.totalorder %s41, %s57
      %p59 = scmp.eq.s32.totalorder %s19, 0
      %p60 = por %p58, %p59
      %s61 = ssub.s32 %s20, %s32
      %s62 = ssub.s32 %s21, %s28
      %s63 = sor.u32 %s61, %s62
      %p64 = scmp.eq.s32.totalorder %s63, 0
      %s66 = sadd.s32 %s65, 1
      %s67 = scalar_select %p64, %s65, %s66
      %p70 = pneg %p64
      %p71 = scmp.eq.s32.totalorder %s13, 1
      %p72 = por %p70, %p71
      %p73 = scmp.ne.s32.totalorder %s65, %s68
      %p74 = scmp.eq.s32.totalorder %s13, 0
      %p75 = por %p73, %p74
      %p76 = scmp.ne.s32.totalorder %s65, %s68
      %p77 = scmp.eq.s32.totalorder %s18, 1
      %p78 = por %p76, %p77
      %p79 = scmp.ne.s32.totalorder %s68, %s69
      %p80 = scmp.eq.s32.totalorder %s18, 0
      %p81 = por %p79, %p80
      %p82 = scmp.ne.s32.totalorder %s68, %s69
      %p83 = scmp.eq.s32.totalorder %s19, 1
      %p84 = por %p82, %p83
      %p86 = scmp.ne.s32.totalorder %s69, %s85
      %p87 = scmp.eq.s32.totalorder %s19, 0
      %p88 = por %p86, %p87
      %p89 = scmp.le.s32.totalorder 1, %s13
      %p90 = scmp.lt.s32.totalorder %s13, 3
      %p91 = pnand %p89, %p90
      %p92 = pneg %p91
      // Predicated region
      $region9: #{tpu_custom_call.1} parent=5 // pred_check
        _
      $region10: #{tpu_custom_call.1} parent=5 // pred_check_branch
        %94 = sbr.rel (%p91) target = $region12
      $region11: #{tpu_custom_call.1} parent=5 // pred_region
        %s95 = ssub.s32 %s13, 1
      $region12: #{tpu_custom_call.1} parent=5 // pred_fallthru
        _
      %p96 = scmp.lt.s32.totalorder %s13, 2
      // Predicated region
      $region13: #{tpu_custom_call.1} parent=5 // pred_check
        %p97 = pneg %p96
      $region14: #{tpu_custom_call.1} parent=5 // pred_check_branch
        %99 = sbr.rel (%p97) target = $region16
      $region15: #{tpu_custom_call.1} parent=5 // pred_region
        // Predicated region
        $region17: #{tpu_custom_call.1} parent=15 // pred_check
          %p100 = pneg %p47
        $region18: #{tpu_custom_call.1} parent=15 // pred_check_branch
          %102 = sbr.rel (%p100) target = $region20
        $region19: #{tpu_custom_call.1} parent=15 // pred_region
          %s103 = sand.u32 %s37, 1
          %s104 = scalar_lea.sflag [#allocation3], %s103
          %s105 = sand.u32 %s37, 1
          %s106 = smul.addr %s105, 64
          %s107 = scalar_lea.vmem [#allocation2], %s106
          %109 = vsyncadd %s104, 0
          %s110 = smul.addr %s21, 2
          %s111 = smul.addr %s20, 8
          %s112 = sadd.s32 %s110, %s111
          %s113 = smul.addr %s112, 8
          %s114 = scalar_lea.hbm %s0, %s113
          %s115 = sshll.u32 %s114, 4
          %s116 = int_to_ptr.hbm [resolvable:$true] %s115
          %s117 = sshll.u32 %s107, 4
          %s118 = int_to_ptr.vmem [resolvable:$true] %s117
          %123 = dma.hbm_to_vmem [thread:$0]  %s116, 1024, %s118, %s104, 128, 128, 8
        $region20: #{tpu_custom_call.1} parent=15 // pred_fallthru
          _
      $region16: #{tpu_custom_call.1} parent=5 // pred_fallthru
        _
      %p124 = scmp.le.s32.totalorder 1, %s13
      %p125 = scmp.lt.s32.totalorder %s13, 3
      %p126 = pnand %p124, %p125
      %p127 = pneg %p126
      // Predicated region
      $region21: #{tpu_custom_call.1} parent=5 // pred_check
        _
      $region22: #{tpu_custom_call.1} parent=5 // pred_check_branch
        %129 = sbr.rel (%p126) target = $region24
      $region23: #{tpu_custom_call.1} parent=5 // pred_region
        %s130 = ssub.s32 %s13, 1
        %s131 = sand.u32 %s40, 1
        %s132 = scalar_lea.sflag [#allocation3], %s131
        %s133 = sand.u32 %s40, 1
        %s134 = smul.addr %s133, 64
        %s135 = scalar_lea.vmem [#allocation2], %s134
        // Predicated region
        $region25: #{tpu_custom_call.1} parent=23 // pred_check
          %p136 = pneg %p53
        $region26: #{tpu_custom_call.1} parent=23 // pred_check_branch
          %138 = sbr.rel (%p136) target = $region28
        $region27: #{tpu_custom_call.1} parent=23 // pred_region
          %140 = dma.done %s132, 1024
        $region28: #{tpu_custom_call.1} parent=23 // pred_fallthru
          _
        %s141 = sand.u32 %s40, 1
        %s142 = scalar_lea.sflag [#allocation3], %s141
        %s143 = sand.u32 %s40, 1
        %s144 = smul.addr %s143, 64
        %s145 = scalar_lea.vmem [#allocation2], %s144
        %p146 = pneg %p53
        %p147 = pneg %p50
        %p148 = pneg %p81
        %p149 = pneg %p78
        %s150 = sand.u32 %s68, 1
        %s151 = scalar_lea.sflag [#allocation4], %s150
        %s152 = sand.u32 %s68, 1
        %s153 = smul.addr %s152, 16
        %s154 = scalar_lea.vmem [#allocation5], %s153
        %v155 = vld [vmem:[%s135] sm:$0xff]
        %v156 = vld [vmem:[%s135 + $0x8] sm:$0xff]
        %s157 = scalar_lea.vmem %s135, 16 [#allocation2]
        %v158 = vld [vmem:[%s157] sm:$0xff]
        %v159 = vld [vmem:[%s157 + $0x8] sm:$0xff]
        %s160 = scalar_lea.vmem %s135, 32 [#allocation2]
        %v161 = vld [vmem:[%s160] sm:$0xff]
        %v162 = vld [vmem:[%s160 + $0x8] sm:$0xff]
        %s163 = scalar_lea.vmem %s135, 48 [#allocation2]
        %v164 = vld [vmem:[%s163] sm:$0xff]
        %v165 = vld [vmem:[%s163 + $0x8] sm:$0xff]
        %v166 = vadd.f32 %v155, %v164
        %v167 = vadd.f32 %v156, %v165
        %v168 = vmul.f32 %v166, 0.5
        %v169 = vmul.f32 %v167, 0.5
        %v170 = vadd.f32 %v158, %v161
        %v171 = vadd.f32 %v159, %v162
        %v172 = vmul.f32 %v170, 0.5
        %v173 = vmul.f32 %v171, 0.5
        %v174 = vsub.f32 %v155, %v164
        %v175 = vsub.f32 %v156, %v165
        %v176 = vmul.f32 %v174, 0.5
        %v177 = vmul.f32 %v175, 0.5
        %v178 = vsub.f32 %v158, %v161
        %v179 = vsub.f32 %v159, %v162
        %v180 = vmul.f32 %v178, 0.5
        %v181 = vmul.f32 %v179, 0.5
        %v182 = vsub.f32 %v168, %v172
        %v183 = vsub.f32 %v169, %v173
        %v184 = vsub.f32 %v176, %v180
        %v185 = vsub.f32 %v177, %v181
        %v186 = vadd.f32 %v176, %v180
        %v187 = vadd.f32 %v177, %v181
        %v188 = vadd.f32 %v168, %v172
        %v189 = vadd.f32 %v169, %v173
        %v190 = vperm.slane %v182, 0
        %v191 = vlaneseq
        %v192 = vshrl.u32 %v191, 7
        %194 = vset.pattern.permute.xlu0 %v192
        %195 = vperm.xlu0 %194, %v190
        %v196 = vpop.permute.xlu0 %195
        %v197 = vlaneseq
        %v198 = vshrl.u32 %v197, 7
        %v199 = vadd.s32 %v198, 8
        %200 = vset.pattern.permute.xlu0 %v199
        %201 = vperm.xlu0 %200, %v190
        %v202 = vpop.permute.xlu0 %201
        %v203 = vperm.slane %v182, 1
        %v204 = vlaneseq
        %v205 = vshrl.u32 %v204, 7
        %207 = vset.pattern.permute.xlu0 %v205
        %208 = vperm.xlu0 %207, %v203
        %v209 = vpop.permute.xlu0 %208
        %v210 = vlaneseq
        %v211 = vshrl.u32 %v210, 7
        %v212 = vadd.s32 %v211, 8
        %213 = vset.pattern.permute.xlu0 %v212
        %214 = vperm.xlu0 %213, %v203
        %v215 = vpop.permute.xlu0 %214
        %v216 = vperm.slane %v182, 2
        %v217 = vlaneseq
        %v218 = vshrl.u32 %v217, 7
        %220 = vset.pattern.permute.xlu0 %v218
        %221 = vperm.xlu0 %220, %v216
        %v222 = vpop.permute.xlu0 %221
        %v223 = vlaneseq
        %v224 = vshrl.u32 %v223, 7
        %v225 = vadd.s32 %v224, 8
        %226 = vset.pattern.permute.xlu0 %v225
        %227 = vperm.xlu0 %226, %v216
        %v228 = vpop.permute.xlu0 %227
        %v229 = vperm.slane %v182, 3
        %v230 = vlaneseq
        %v231 = vshrl.u32 %v230, 7
        %233 = vset.pattern.permute.xlu0 %v231
        %234 = vperm.xlu0 %233, %v229
        %v235 = vpop.permute.xlu0 %234
        %v236 = vlaneseq
        %v237 = vshrl.u32 %v236, 7
        %v238 = vadd.s32 %v237, 8
        %239 = vset.pattern.permute.xlu0 %v238
        %240 = vperm.xlu0 %239, %v229
        %v241 = vpop.permute.xlu0 %240
        %v242 = vperm.slane %v182, 4
        %v243 = vlaneseq
        %v244 = vshrl.u32 %v243, 7
        %246 = vset.pattern.permute.xlu0 %v244
        %247 = vperm.xlu0 %246, %v242
        %v248 = vpop.permute.xlu0 %247
        %v249 = vlaneseq
        %v250 = vshrl.u32 %v249, 7
        %v251 = vadd.s32 %v250, 8
        %252 = vset.pattern.permute.xlu0 %v251
        %253 = vperm.xlu0 %252, %v242
        %v254 = vpop.permute.xlu0 %253
        %v255 = vperm.slane %v182, 5
        %v256 = vlaneseq
        %v257 = vshrl.u32 %v256, 7
        %259 = vset.pattern.permute.xlu0 %v257
        %260 = vperm.xlu0 %259, %v255
        %v261 = vpop.permute.xlu0 %260
        %v262 = vlaneseq
        %v263 = vshrl.u32 %v262, 7
        %v264 = vadd.s32 %v263, 8
        %265 = vset.pattern.permute.xlu0 %v264
        %266 = vperm.xlu0 %265, %v255
        %v267 = vpop.permute.xlu0 %266
        %v268 = vperm.slane %v182, 6
        %v269 = vlaneseq
        %v270 = vshrl.u32 %v269, 7
        %272 = vset.pattern.permute.xlu0 %v270
        %273 = vperm.xlu0 %272, %v268
        %v274 = vpop.permute.xlu0 %273
        %v275 = vlaneseq
        %v276 = vshrl.u32 %v275, 7
        %v277 = vadd.s32 %v276, 8
        %278 = vset.pattern.permute.xlu0 %v277
        %279 = vperm.xlu0 %278, %v268
        %v280 = vpop.permute.xlu0 %279
        %v281 = vperm.slane %v182, 7
        %v282 = vlaneseq
        %v283 = vshrl.u32 %v282, 7
        %285 = vset.pattern.permute.xlu0 %v283
        %286 = vperm.xlu0 %285, %v281
        %v287 = vpop.permute.xlu0 %286
        %v288 = vlaneseq
        %v289 = vshrl.u32 %v288, 7
        %v290 = vadd.s32 %v289, 8
        %291 = vset.pattern.permute.xlu0 %v290
        %292 = vperm.xlu0 %291, %v281
        %v293 = vpop.permute.xlu0 %292
        %v294 = vperm.slane %v183, 0
        %v295 = vlaneseq
        %v296 = vshrl.u32 %v295, 7
        %298 = vset.pattern.permute.xlu0 %v296
        %299 = vperm.xlu0 %298, %v294
        %v300 = vpop.permute.xlu0 %299
        %v301 = vlaneseq
        %v302 = vshrl.u32 %v301, 7
        %v303 = vadd.s32 %v302, 8
        %304 = vset.pattern.permute.xlu0 %v303
        %305 = vperm.xlu0 %304, %v294
        %v306 = vpop.permute.xlu0 %305
        %v307 = vperm.slane %v183, 1
        %v308 = vlaneseq
        %v309 = vshrl.u32 %v308, 7
        %311 = vset.pattern.permute.xlu0 %v309
        %312 = vperm.xlu0 %311, %v307
        %v313 = vpop.permute.xlu0 %312
        %v314 = vlaneseq
        %v315 = vshrl.u32 %v314, 7
        %v316 = vadd.s32 %v315, 8
        %317 = vset.pattern.permute.xlu0 %v316
        %318 = vperm.xlu0 %317, %v307
        %v319 = vpop.permute.xlu0 %318
        %v320 = vperm.slane %v183, 2
        %v321 = vlaneseq
        %v322 = vshrl.u32 %v321, 7
        %324 = vset.pattern.permute.xlu0 %v322
        %325 = vperm.xlu0 %324, %v320
        %v326 = vpop.permute.xlu0 %325
        %v327 = vlaneseq
        %v328 = vshrl.u32 %v327, 7
        %v329 = vadd.s32 %v328, 8
        %330 = vset.pattern.permute.xlu0 %v329
        %331 = vperm.xlu0 %330, %v320
        %v332 = vpop.permute.xlu0 %331
        %v333 = vperm.slane %v183, 3
        %v334 = vlaneseq
        %v335 = vshrl.u32 %v334, 7
        %337 = vset.pattern.permute.xlu0 %v335
        %338 = vperm.xlu0 %337, %v333
        %v339 = vpop.permute.xlu0 %338
        %v340 = vlaneseq
        %v341 = vshrl.u32 %v340, 7
        %v342 = vadd.s32 %v341, 8
        %343 = vset.pattern.permute.xlu0 %v342
        %344 = vperm.xlu0 %343, %v333
        %v345 = vpop.permute.xlu0 %344
        %v346 = vperm.slane %v183, 4
        %v347 = vlaneseq
        %v348 = vshrl.u32 %v347, 7
        %350 = vset.pattern.permute.xlu0 %v348
        %351 = vperm.xlu0 %350, %v346
        %v352 = vpop.permute.xlu0 %351
        %v353 = vlaneseq
        %v354 = vshrl.u32 %v353, 7
        %v355 = vadd.s32 %v354, 8
        %356 = vset.pattern.permute.xlu0 %v355
        %357 = vperm.xlu0 %356, %v346
        %v358 = vpop.permute.xlu0 %357
        %v359 = vperm.slane %v183, 5
        %v360 = vlaneseq
        %v361 = vshrl.u32 %v360, 7
        %363 = vset.pattern.permute.xlu0 %v361
        %364 = vperm.xlu0 %363, %v359
        %v365 = vpop.permute.xlu0 %364
        %v366 = vlaneseq
        %v367 = vshrl.u32 %v366, 7
        %v368 = vadd.s32 %v367, 8
        %369 = vset.pattern.permute.xlu0 %v368
        %370 = vperm.xlu0 %369, %v359
        %v371 = vpop.permute.xlu0 %370
        %v372 = vperm.slane %v183, 6
        %v373 = vlaneseq
        %v374 = vshrl.u32 %v373, 7
        %376 = vset.pattern.permute.xlu0 %v374
        %377 = vperm.xlu0 %376, %v372
        %v378 = vpop.permute.xlu0 %377
        %v379 = vlaneseq
        %v380 = vshrl.u32 %v379, 7
        %v381 = vadd.s32 %v380, 8
        %382 = vset.pattern.permute.xlu0 %v381
        %383 = vperm.xlu0 %382, %v372
        %v384 = vpop.permute.xlu0 %383
        %v385 = vperm.slane %v183, 7
        %v386 = vlaneseq
        %v387 = vshrl.u32 %v386, 7
        %389 = vset.pattern.permute.xlu0 %v387
        %390 = vperm.xlu0 %389, %v385
        %v391 = vpop.permute.xlu0 %390
        %v392 = vlaneseq
        %v393 = vshrl.u32 %v392, 7
        %v394 = vadd.s32 %v393, 8
        %395 = vset.pattern.permute.xlu0 %v394
        %396 = vperm.xlu0 %395, %v385
        %v397 = vpop.permute.xlu0 %396
        %v398 = vperm.slane %v186, 0
        %v399 = vlaneseq
        %v400 = vshrl.u32 %v399, 7
        %402 = vset.pattern.permute.xlu0 %v400
        %403 = vperm.xlu0 %402, %v398
        %v404 = vpop.permute.xlu0 %403
        %v405 = vlaneseq
        %v406 = vshrl.u32 %v405, 7
        %v407 = vadd.s32 %v406, 8
        %408 = vset.pattern.permute.xlu0 %v407
        %409 = vperm.xlu0 %408, %v398
        %v410 = vpop.permute.xlu0 %409
        %v411 = vperm.slane %v186, 1
        %v412 = vlaneseq
        %v413 = vshrl.u32 %v412, 7
        %415 = vset.pattern.permute.xlu0 %v413
        %416 = vperm.xlu0 %415, %v411
        %v417 = vpop.permute.xlu0 %416
        %v418 = vlaneseq
        %v419 = vshrl.u32 %v418, 7
        %v420 = vadd.s32 %v419, 8
        %421 = vset.pattern.permute.xlu0 %v420
        %422 = vperm.xlu0 %421, %v411
        %v423 = vpop.permute.xlu0 %422
        %v424 = vperm.slane %v186, 2
        %v425 = vlaneseq
        %v426 = vshrl.u32 %v425, 7
        %428 = vset.pattern.permute.xlu0 %v426
        %429 = vperm.xlu0 %428, %v424
        %v430 = vpop.permute.xlu0 %429
        %v431 = vlaneseq
        %v432 = vshrl.u32 %v431, 7
        %v433 = vadd.s32 %v432, 8
        %434 = vset.pattern.permute.xlu0 %v433
        %435 = vperm.xlu0 %434, %v424
        %v436 = vpop.permute.xlu0 %435
        %v437 = vperm.slane %v186, 3
        %v438 = vlaneseq
        %v439 = vshrl.u32 %v438, 7
        %441 = vset.pattern.permute.xlu0 %v439
        %442 = vperm.xlu0 %441, %v437
        %v443 = vpop.permute.xlu0 %442
        %v444 = vlaneseq
        %v445 = vshrl.u32 %v444, 7
        %v446 = vadd.s32 %v445, 8
        %447 = vset.pattern.permute.xlu0 %v446
        %448 = vperm.xlu0 %447, %v437
        %v449 = vpop.permute.xlu0 %448
        %v450 = vperm.slane %v186, 4
        %v451 = vlaneseq
        %v452 = vshrl.u32 %v451, 7
        %454 = vset.pattern.permute.xlu0 %v452
        %455 = vperm.xlu0 %454, %v450
        %v456 = vpop.permute.xlu0 %455
        %v457 = vlaneseq
        %v458 = vshrl.u32 %v457, 7
        %v459 = vadd.s32 %v458, 8
        %460 = vset.pattern.permute.xlu0 %v459
        %461 = vperm.xlu0 %460, %v450
        %v462 = vpop.permute.xlu0 %461
        %v463 = vperm.slane %v186, 5
        %v464 = vlaneseq
        %v465 = vshrl.u32 %v464, 7
        %467 = vset.pattern.permute.xlu0 %v465
        %468 = vperm.xlu0 %467, %v463
        %v469 = vpop.permute.xlu0 %468
        %v470 = vlaneseq
        %v471 = vshrl.u32 %v470, 7
        %v472 = vadd.s32 %v471, 8
        %473 = vset.pattern.permute.xlu0 %v472
        %474 = vperm.xlu0 %473, %v463
        %v475 = vpop.permute.xlu0 %474
        %v476 = vperm.slane %v186, 6
        %v477 = vlaneseq
        %v478 = vshrl.u32 %v477, 7
        %480 = vset.pattern.permute.xlu0 %v478
        %481 = vperm.xlu0 %480, %v476
        %v482 = vpop.permute.xlu0 %481
        %v483 = vlaneseq
        %v484 = vshrl.u32 %v483, 7
        %v485 = vadd.s32 %v484, 8
        %486 = vset.pattern.permute.xlu0 %v485
        %487 = vperm.xlu0 %486, %v476
        %v488 = vpop.permute.xlu0 %487
        %v489 = vperm.slane %v186, 7
        %v490 = vlaneseq
        %v491 = vshrl.u32 %v490, 7
        %493 = vset.pattern.permute.xlu0 %v491
        %494 = vperm.xlu0 %493, %v489
        %v495 = vpop.permute.xlu0 %494
        %v496 = vlaneseq
        %v497 = vshrl.u32 %v496, 7
        %v498 = vadd.s32 %v497, 8
        %499 = vset.pattern.permute.xlu0 %v498
        %500 = vperm.xlu0 %499, %v489
        %v501 = vpop.permute.xlu0 %500
        %v502 = vperm.slane %v187, 0
        %v503 = vlaneseq
        %v504 = vshrl.u32 %v503, 7
        %506 = vset.pattern.permute.xlu0 %v504
        %507 = vperm.xlu0 %506, %v502
        %v508 = vpop.permute.xlu0 %507
        %v509 = vlaneseq
        %v510 = vshrl.u32 %v509, 7
        %v511 = vadd.s32 %v510, 8
        %512 = vset.pattern.permute.xlu0 %v511
        %513 = vperm.xlu0 %512, %v502
        %v514 = vpop.permute.xlu0 %513
        %v515 = vperm.slane %v187, 1
        %v516 = vlaneseq
        %v517 = vshrl.u32 %v516, 7
        %519 = vset.pattern.permute.xlu0 %v517
        %520 = vperm.xlu0 %519, %v515
        %v521 = vpop.permute.xlu0 %520
        %v522 = vlaneseq
        %v523 = vshrl.u32 %v522, 7
        %v524 = vadd.s32 %v523, 8
        %525 = vset.pattern.permute.xlu0 %v524
        %526 = vperm.xlu0 %525, %v515
        %v527 = vpop.permute.xlu0 %526
        %v528 = vperm.slane %v187, 2
        %v529 = vlaneseq
        %v530 = vshrl.u32 %v529, 7
        %532 = vset.pattern.permute.xlu0 %v530
        %533 = vperm.xlu0 %532, %v528
        %v534 = vpop.permute.xlu0 %533
        %v535 = vlaneseq
        %v536 = vshrl.u32 %v535, 7
        %v537 = vadd.s32 %v536, 8
        %538 = vset.pattern.permute.xlu0 %v537
        %539 = vperm.xlu0 %538, %v528
        %v540 = vpop.permute.xlu0 %539
        %v541 = vperm.slane %v187, 3
        %v542 = vlaneseq
        %v543 = vshrl.u32 %v542, 7
        %545 = vset.pattern.permute.xlu0 %v543
        %546 = vperm.xlu0 %545, %v541
        %v547 = vpop.permute.xlu0 %546
        %v548 = vlaneseq
        %v549 = vshrl.u32 %v548, 7
        %v550 = vadd.s32 %v549, 8
        %551 = vset.pattern.permute.xlu0 %v550
        %552 = vperm.xlu0 %551, %v541
        %v553 = vpop.permute.xlu0 %552
        %v554 = vperm.slane %v187, 4
        %v555 = vlaneseq
        %v556 = vshrl.u32 %v555, 7
        %558 = vset.pattern.permute.xlu0 %v556
        %559 = vperm.xlu0 %558, %v554
        %v560 = vpop.permute.xlu0 %559
        %v561 = vlaneseq
        %v562 = vshrl.u32 %v561, 7
        %v563 = vadd.s32 %v562, 8
        %564 = vset.pattern.permute.xlu0 %v563
        %565 = vperm.xlu0 %564, %v554
        %v566 = vpop.permute.xlu0 %565
        %v567 = vperm.slane %v187, 5
        %v568 = vlaneseq
        %v569 = vshrl.u32 %v568, 7
        %571 = vset.pattern.permute.xlu0 %v569
        %572 = vperm.xlu0 %571, %v567
        %v573 = vpop.permute.xlu0 %572
        %v574 = vlaneseq
        %v575 = vshrl.u32 %v574, 7
        %v576 = vadd.s32 %v575, 8
        %577 = vset.pattern.permute.xlu0 %v576
        %578 = vperm.xlu0 %577, %v567
        %v579 = vpop.permute.xlu0 %578
        %v580 = vperm.slane %v187, 6
        %v581 = vlaneseq
        %v582 = vshrl.u32 %v581, 7
        %584 = vset.pattern.permute.xlu0 %v582
        %585 = vperm.xlu0 %584, %v580
        %v586 = vpop.permute.xlu0 %585
        %v587 = vlaneseq
        %v588 = vshrl.u32 %v587, 7
        %v589 = vadd.s32 %v588, 8
        %590 = vset.pattern.permute.xlu0 %v589
        %591 = vperm.xlu0 %590, %v580
        %v592 = vpop.permute.xlu0 %591
        %v593 = vperm.slane %v187, 7
        %v594 = vlaneseq
        %v595 = vshrl.u32 %v594, 7
        %597 = vset.pattern.permute.xlu0 %v595
        %598 = vperm.xlu0 %597, %v593
        %v599 = vpop.permute.xlu0 %598
        %v600 = vlaneseq
        %v601 = vshrl.u32 %v600, 7
        %v602 = vadd.s32 %v601, 8
        %603 = vset.pattern.permute.xlu0 %v602
        %604 = vperm.xlu0 %603, %v593
        %v605 = vpop.permute.xlu0 %604
        %vm606 = vcmask 7168
        %v607 = vsel %vm606, %v196, %v404
        %v608 = vsel %vm606, %v202, %v410
        %v609 = vsel %vm606, %v209, %v417
        %v610 = vsel %vm606, %v215, %v423
        %v611 = vsel %vm606, %v222, %v430
        %v612 = vsel %vm606, %v228, %v436
        %v613 = vsel %vm606, %v235, %v443
        %v614 = vsel %vm606, %v241, %v449
        %v615 = vsel %vm606, %v248, %v456
        %v616 = vsel %vm606, %v254, %v462
        %v617 = vsel %vm606, %v261, %v469
        %v618 = vsel %vm606, %v267, %v475
        %v619 = vsel %vm606, %v274, %v482
        %v620 = vsel %vm606, %v280, %v488
        %v621 = vsel %vm606, %v287, %v495
        %v622 = vsel %vm606, %v293, %v501
        %v623 = vsel %vm606, %v300, %v508
        %v624 = vsel %vm606, %v306, %v514
        %v625 = vsel %vm606, %v313, %v521
        %v626 = vsel %vm606, %v319, %v527
        %v627 = vsel %vm606, %v326, %v534
        %v628 = vsel %vm606, %v332, %v540
        %v629 = vsel %vm606, %v339, %v547
        %v630 = vsel %vm606, %v345, %v553
        %v631 = vsel %vm606, %v352, %v560
        %v632 = vsel %vm606, %v358, %v566
        %v633 = vsel %vm606, %v365, %v573
        %v634 = vsel %vm606, %v371, %v579
        %v635 = vsel %vm606, %v378, %v586
        %v636 = vsel %vm606, %v384, %v592
        %v637 = vsel %vm606, %v391, %v599
        %v638 = vsel %vm606, %v397, %v605
        %v639 = vperm.slane %v184, 0
        %v640 = vlaneseq
        %v641 = vshrl.u32 %v640, 7
        %643 = vset.pattern.permute.xlu0 %v641
        %644 = vperm.xlu0 %643, %v639
        %v645 = vpop.permute.xlu0 %644
        %v646 = vlaneseq
        %v647 = vshrl.u32 %v646, 7
        %v648 = vadd.s32 %v647, 8
        %649 = vset.pattern.permute.xlu0 %v648
        %650 = vperm.xlu0 %649, %v639
        %v651 = vpop.permute.xlu0 %650
        %v652 = vperm.slane %v184, 1
        %v653 = vlaneseq
        %v654 = vshrl.u32 %v653, 7
        %656 = vset.pattern.permute.xlu0 %v654
        %657 = vperm.xlu0 %656, %v652
        %v658 = vpop.permute.xlu0 %657
        %v659 = vlaneseq
        %v660 = vshrl.u32 %v659, 7
        %v661 = vadd.s32 %v660, 8
        %662 = vset.pattern.permute.xlu0 %v661
        %663 = vperm.xlu0 %662, %v652
        %v664 = vpop.permute.xlu0 %663
        %v665 = vperm.slane %v184, 2
        %v666 = vlaneseq
        %v667 = vshrl.u32 %v666, 7
        %669 = vset.pattern.permute.xlu0 %v667
        %670 = vperm.xlu0 %669, %v665
        %v671 = vpop.permute.xlu0 %670
        %v672 = vlaneseq
        %v673 = vshrl.u32 %v672, 7
        %v674 = vadd.s32 %v673, 8
        %675 = vset.pattern.permute.xlu0 %v674
        %676 = vperm.xlu0 %675, %v665
        %v677 = vpop.permute.xlu0 %676
        %v678 = vperm.slane %v184, 3
        %v679 = vlaneseq
        %v680 = vshrl.u32 %v679, 7
        %682 = vset.pattern.permute.xlu0 %v680
        %683 = vperm.xlu0 %682, %v678
        %v684 = vpop.permute.xlu0 %683
        %v685 = vlaneseq
        %v686 = vshrl.u32 %v685, 7
        %v687 = vadd.s32 %v686, 8
        %688 = vset.pattern.permute.xlu0 %v687
        %689 = vperm.xlu0 %688, %v678
        %v690 = vpop.permute.xlu0 %689
        %v691 = vperm.slane %v184, 4
        %v692 = vlaneseq
        %v693 = vshrl.u32 %v692, 7
        %695 = vset.pattern.permute.xlu0 %v693
        %696 = vperm.xlu0 %695, %v691
        %v697 = vpop.permute.xlu0 %696
        %v698 = vlaneseq
        %v699 = vshrl.u32 %v698, 7
        %v700 = vadd.s32 %v699, 8
        %701 = vset.pattern.permute.xlu0 %v700
        %702 = vperm.xlu0 %701, %v691
        %v703 = vpop.permute.xlu0 %702
        %v704 = vperm.slane %v184, 5
        %v705 = vlaneseq
        %v706 = vshrl.u32 %v705, 7
        %708 = vset.pattern.permute.xlu0 %v706
        %709 = vperm.xlu0 %708, %v704
        %v710 = vpop.permute.xlu0 %709
        %v711 = vlaneseq
        %v712 = vshrl.u32 %v711, 7
        %v713 = vadd.s32 %v712, 8
        %714 = vset.pattern.permute.xlu0 %v713
        %715 = vperm.xlu0 %714, %v704
        %v716 = vpop.permute.xlu0 %715
        %v717 = vperm.slane %v184, 6
        %v718 = vlaneseq
        %v719 = vshrl.u32 %v718, 7
        %721 = vset.pattern.permute.xlu0 %v719
        %722 = vperm.xlu0 %721, %v717
        %v723 = vpop.permute.xlu0 %722
        %v724 = vlaneseq
        %v725 = vshrl.u32 %v724, 7
        %v726 = vadd.s32 %v725, 8
        %727 = vset.pattern.permute.xlu0 %v726
        %728 = vperm.xlu0 %727, %v717
        %v729 = vpop.permute.xlu0 %728
        %v730 = vperm.slane %v184, 7
        %v731 = vlaneseq
        %v732 = vshrl.u32 %v731, 7
        %734 = vset.pattern.permute.xlu0 %v732
        %735 = vperm.xlu0 %734, %v730
        %v736 = vpop.permute.xlu0 %735
        %v737 = vlaneseq
        %v738 = vshrl.u32 %v737, 7
        %v739 = vadd.s32 %v738, 8
        %740 = vset.pattern.permute.xlu0 %v739
        %741 = vperm.xlu0 %740, %v730
        %v742 = vpop.permute.xlu0 %741
        %v743 = vperm.slane %v185, 0
        %v744 = vlaneseq
        %v745 = vshrl.u32 %v744, 7
        %747 = vset.pattern.permute.xlu0 %v745
        %748 = vperm.xlu0 %747, %v743
        %v749 = vpop.permute.xlu0 %748
        %v750 = vlaneseq
        %v751 = vshrl.u32 %v750, 7
        %v752 = vadd.s32 %v751, 8
        %753 = vset.pattern.permute.xlu0 %v752
        %754 = vperm.xlu0 %753, %v743
        %v755 = vpop.permute.xlu0 %754
        %v756 = vperm.slane %v185, 1
        %v757 = vlaneseq
        %v758 = vshrl.u32 %v757, 7
        %760 = vset.pattern.permute.xlu0 %v758
        %761 = vperm.xlu0 %760, %v756
        %v762 = vpop.permute.xlu0 %761
        %v763 = vlaneseq
        %v764 = vshrl.u32 %v763, 7
        %v765 = vadd.s32 %v764, 8
        %766 = vset.pattern.permute.xlu0 %v765
        %767 = vperm.xlu0 %766, %v756
        %v768 = vpop.permute.xlu0 %767
        %v769 = vperm.slane %v185, 2
        %v770 = vlaneseq
        %v771 = vshrl.u32 %v770, 7
        %773 = vset.pattern.permute.xlu0 %v771
        %774 = vperm.xlu0 %773, %v769
        %v775 = vpop.permute.xlu0 %774
        %v776 = vlaneseq
        %v777 = vshrl.u32 %v776, 7
        %v778 = vadd.s32 %v777, 8
        %779 = vset.pattern.permute.xlu0 %v778
        %780 = vperm.xlu0 %779, %v769
        %v781 = vpop.permute.xlu0 %780
        %v782 = vperm.slane %v185, 3
        %v783 = vlaneseq
        %v784 = vshrl.u32 %v783, 7
        %786 = vset.pattern.permute.xlu0 %v784
        %787 = vperm.xlu0 %786, %v782
        %v788 = vpop.permute.xlu0 %787
        %v789 = vlaneseq
        %v790 = vshrl.u32 %v789, 7
        %v791 = vadd.s32 %v790, 8
        %792 = vset.pattern.permute.xlu0 %v791
        %793 = vperm.xlu0 %792, %v782
        %v794 = vpop.permute.xlu0 %793
        %v795 = vperm.slane %v185, 4
        %v796 = vlaneseq
        %v797 = vshrl.u32 %v796, 7
        %799 = vset.pattern.permute.xlu0 %v797
        %800 = vperm.xlu0 %799, %v795
        %v801 = vpop.permute.xlu0 %800
        %v802 = vlaneseq
        %v803 = vshrl.u32 %v802, 7
        %v804 = vadd.s32 %v803, 8
        %805 = vset.pattern.permute.xlu0 %v804
        %806 = vperm.xlu0 %805, %v795
        %v807 = vpop.permute.xlu0 %806
        %v808 = vperm.slane %v185, 5
        %v809 = vlaneseq
        %v810 = vshrl.u32 %v809, 7
        %812 = vset.pattern.permute.xlu0 %v810
        %813 = vperm.xlu0 %812, %v808
        %v814 = vpop.permute.xlu0 %813
        %v815 = vlaneseq
        %v816 = vshrl.u32 %v815, 7
        %v817 = vadd.s32 %v816, 8
        %818 = vset.pattern.permute.xlu0 %v817
        %819 = vperm.xlu0 %818, %v808
        %v820 = vpop.permute.xlu0 %819
        %v821 = vperm.slane %v185, 6
        %v822 = vlaneseq
        %v823 = vshrl.u32 %v822, 7
        %825 = vset.pattern.permute.xlu0 %v823
        %826 = vperm.xlu0 %825, %v821
        %v827 = vpop.permute.xlu0 %826
        %v828 = vlaneseq
        %v829 = vshrl.u32 %v828, 7
        %v830 = vadd.s32 %v829, 8
        %831 = vset.pattern.permute.xlu0 %v830
        %832 = vperm.xlu0 %831, %v821
        %v833 = vpop.permute.xlu0 %832
        %v834 = vperm.slane %v185, 7
        %v835 = vlaneseq
        %v836 = vshrl.u32 %v835, 7
        %838 = vset.pattern.permute.xlu0 %v836
        %839 = vperm.xlu0 %838, %v834
        %v840 = vpop.permute.xlu0 %839
        %v841 = vlaneseq
        %v842 = vshrl.u32 %v841, 7
        %v843 = vadd.s32 %v842, 8
        %844 = vset.pattern.permute.xlu0 %v843
        %845 = vperm.xlu0 %844, %v834
        %v846 = vpop.permute.xlu0 %845
        %v847 = vperm.slane %v188, 0
        %v848 = vlaneseq
        %v849 = vshrl.u32 %v848, 7
        %851 = vset.pattern.permute.xlu0 %v849
        %852 = vperm.xlu0 %851, %v847
        %v853 = vpop.permute.xlu0 %852
        %v854 = vlaneseq
        %v855 = vshrl.u32 %v854, 7
        %v856 = vadd.s32 %v855, 8
        %857 = vset.pattern.permute.xlu0 %v856
        %858 = vperm.xlu0 %857, %v847
        %v859 = vpop.permute.xlu0 %858
        %v860 = vperm.slane %v188, 1
        %v861 = vlaneseq
        %v862 = vshrl.u32 %v861, 7
        %864 = vset.pattern.permute.xlu0 %v862
        %865 = vperm.xlu0 %864, %v860
        %v866 = vpop.permute.xlu0 %865
        %v867 = vlaneseq
        %v868 = vshrl.u32 %v867, 7
        %v869 = vadd.s32 %v868, 8
        %870 = vset.pattern.permute.xlu0 %v869
        %871 = vperm.xlu0 %870, %v860
        %v872 = vpop.permute.xlu0 %871
        %v873 = vperm.slane %v188, 2
        %v874 = vlaneseq
        %v875 = vshrl.u32 %v874, 7
        %877 = vset.pattern.permute.xlu0 %v875
        %878 = vperm.xlu0 %877, %v873
        %v879 = vpop.permute.xlu0 %878
        %v880 = vlaneseq
        %v881 = vshrl.u32 %v880, 7
        %v882 = vadd.s32 %v881, 8
        %883 = vset.pattern.permute.xlu0 %v882
        %884 = vperm.xlu0 %883, %v873
        %v885 = vpop.permute.xlu0 %884
        %v886 = vperm.slane %v188, 3
        %v887 = vlaneseq
        %v888 = vshrl.u32 %v887, 7
        %890 = vset.pattern.permute.xlu0 %v888
        %891 = vperm.xlu0 %890, %v886
        %v892 = vpop.permute.xlu0 %891
        %v893 = vlaneseq
        %v894 = vshrl.u32 %v893, 7
        %v895 = vadd.s32 %v894, 8
        %896 = vset.pattern.permute.xlu0 %v895
        %897 = vperm.xlu0 %896, %v886
        %v898 = vpop.permute.xlu0 %897
        %v899 = vperm.slane %v188, 4
        %v900 = vlaneseq
        %v901 = vshrl.u32 %v900, 7
        %903 = vset.pattern.permute.xlu0 %v901
        %904 = vperm.xlu0 %903, %v899
        %v905 = vpop.permute.xlu0 %904
        %v906 = vlaneseq
        %v907 = vshrl.u32 %v906, 7
        %v908 = vadd.s32 %v907, 8
        %909 = vset.pattern.permute.xlu0 %v908
        %910 = vperm.xlu0 %909, %v899
        %v911 = vpop.permute.xlu0 %910
        %v912 = vperm.slane %v188, 5
        %v913 = vlaneseq
        %v914 = vshrl.u32 %v913, 7
        %916 = vset.pattern.permute.xlu0 %v914
        %917 = vperm.xlu0 %916, %v912
        %v918 = vpop.permute.xlu0 %917
        %v919 = vlaneseq
        %v920 = vshrl.u32 %v919, 7
        %v921 = vadd.s32 %v920, 8
        %922 = vset.pattern.permute.xlu0 %v921
        %923 = vperm.xlu0 %922, %v912
        %v924 = vpop.permute.xlu0 %923
        %v925 = vperm.slane %v188, 6
        %v926 = vlaneseq
        %v927 = vshrl.u32 %v926, 7
        %929 = vset.pattern.permute.xlu0 %v927
        %930 = vperm.xlu0 %929, %v925
        %v931 = vpop.permute.xlu0 %930
        %v932 = vlaneseq
        %v933 = vshrl.u32 %v932, 7
        %v934 = vadd.s32 %v933, 8
        %935 = vset.pattern.permute.xlu0 %v934
        %936 = vperm.xlu0 %935, %v925
        %v937 = vpop.permute.xlu0 %936
        %v938 = vperm.slane %v188, 7
        %v939 = vlaneseq
        %v940 = vshrl.u32 %v939, 7
        %942 = vset.pattern.permute.xlu0 %v940
        %943 = vperm.xlu0 %942, %v938
        %v944 = vpop.permute.xlu0 %943
        %v945 = vlaneseq
        %v946 = vshrl.u32 %v945, 7
        %v947 = vadd.s32 %v946, 8
        %948 = vset.pattern.permute.xlu0 %v947
        %949 = vperm.xlu0 %948, %v938
        %v950 = vpop.permute.xlu0 %949
        %v951 = vperm.slane %v189, 0
        %v952 = vlaneseq
        %v953 = vshrl.u32 %v952, 7
        %955 = vset.pattern.permute.xlu0 %v953
        %956 = vperm.xlu0 %955, %v951
        %v957 = vpop.permute.xlu0 %956
        %v958 = vlaneseq
        %v959 = vshrl.u32 %v958, 7
        %v960 = vadd.s32 %v959, 8
        %961 = vset.pattern.permute.xlu0 %v960
        %962 = vperm.xlu0 %961, %v951
        %v963 = vpop.permute.xlu0 %962
        %v964 = vperm.slane %v189, 1
        %v965 = vlaneseq
        %v966 = vshrl.u32 %v965, 7
        %968 = vset.pattern.permute.xlu0 %v966
        %969 = vperm.xlu0 %968, %v964
        %v970 = vpop.permute.xlu0 %969
        %v971 = vlaneseq
        %v972 = vshrl.u32 %v971, 7
        %v973 = vadd.s32 %v972, 8
        %974 = vset.pattern.permute.xlu0 %v973
        %975 = vperm.xlu0 %974, %v964
        %v976 = vpop.permute.xlu0 %975
        %v977 = vperm.slane %v189, 2
        %v978 = vlaneseq
        %v979 = vshrl.u32 %v978, 7
        %981 = vset.pattern.permute.xlu0 %v979
        %982 = vperm.xlu0 %981, %v977
        %v983 = vpop.permute.xlu0 %982
        %v984 = vlaneseq
        %v985 = vshrl.u32 %v984, 7
        %v986 = vadd.s32 %v985, 8
        %987 = vset.pattern.permute.xlu0 %v986
        %988 = vperm.xlu0 %987, %v977
        %v989 = vpop.permute.xlu0 %988
        %v990 = vperm.slane %v189, 3
        %v991 = vlaneseq
        %v992 = vshrl.u32 %v991, 7
        %994 = vset.pattern.permute.xlu0 %v992
        %995 = vperm.xlu0 %994, %v990
        %v996 = vpop.permute.xlu0 %995
        %v997 = vlaneseq
        %v998 = vshrl.u32 %v997, 7
        %v999 = vadd.s32 %v998, 8
        %1000 = vset.pattern.permute.xlu0 %v999
        %1001 = vperm.xlu0 %1000, %v990
        %v1002 = vpop.permute.xlu0 %1001
        %v1003 = vperm.slane %v189, 4
        %v1004 = vlaneseq
        %v1005 = vshrl.u32 %v1004, 7
        %1007 = vset.pattern.permute.xlu0 %v1005
        %1008 = vperm.xlu0 %1007, %v1003
        %v1009 = vpop.permute.xlu0 %1008
        %v1010 = vlaneseq
        %v1011 = vshrl.u32 %v1010, 7
        %v1012 = vadd.s32 %v1011, 8
        %1013 = vset.pattern.permute.xlu0 %v1012
        %1014 = vperm.xlu0 %1013, %v1003
        %v1015 = vpop.permute.xlu0 %1014
        %v1016 = vperm.slane %v189, 5
        %v1017 = vlaneseq
        %v1018 = vshrl.u32 %v1017, 7
        %1020 = vset.pattern.permute.xlu0 %v1018
        %1021 = vperm.xlu0 %1020, %v1016
        %v1022 = vpop.permute.xlu0 %1021
        %v1023 = vlaneseq
        %v1024 = vshrl.u32 %v1023, 7
        %v1025 = vadd.s32 %v1024, 8
        %1026 = vset.pattern.permute.xlu0 %v1025
        %1027 = vperm.xlu0 %1026, %v1016
        %v1028 = vpop.permute.xlu0 %1027
        %v1029 = vperm.slane %v189, 6
        %v1030 = vlaneseq
        %v1031 = vshrl.u32 %v1030, 7
        %1033 = vset.pattern.permute.xlu0 %v1031
        %1034 = vperm.xlu0 %1033, %v1029
        %v1035 = vpop.permute.xlu0 %1034
        %v1036 = vlaneseq
        %v1037 = vshrl.u32 %v1036, 7
        %v1038 = vadd.s32 %v1037, 8
        %1039 = vset.pattern.permute.xlu0 %v1038
        %1040 = vperm.xlu0 %1039, %v1029
        %v1041 = vpop.permute.xlu0 %1040
        %v1042 = vperm.slane %v189, 7
        %v1043 = vlaneseq
        %v1044 = vshrl.u32 %v1043, 7
        %1046 = vset.pattern.permute.xlu0 %v1044
        %1047 = vperm.xlu0 %1046, %v1042
        %v1048 = vpop.permute.xlu0 %1047
        %v1049 = vlaneseq
        %v1050 = vshrl.u32 %v1049, 7
        %v1051 = vadd.s32 %v1050, 8
        %1052 = vset.pattern.permute.xlu0 %v1051
        %1053 = vperm.xlu0 %1052, %v1042
        %v1054 = vpop.permute.xlu0 %1053
        %v1055 = vsel %vm606, %v645, %v853
        %v1056 = vsel %vm606, %v651, %v859
        %v1057 = vsel %vm606, %v658, %v866
        %v1058 = vsel %vm606, %v664, %v872
        %v1059 = vsel %vm606, %v671, %v879
        %v1060 = vsel %vm606, %v677, %v885
        %v1061 = vsel %vm606, %v684, %v892
        %v1062 = vsel %vm606, %v690, %v898
        %v1063 = vsel %vm606, %v697, %v905
        %v1064 = vsel %vm606, %v703, %v911
        %v1065 = vsel %vm606, %v710, %v918
        %v1066 = vsel %vm606, %v716, %v924
        %v1067 = vsel %vm606, %v723, %v931
        %v1068 = vsel %vm606, %v729, %v937
        %v1069 = vsel %vm606, %v736, %v944
        %v1070 = vsel %vm606, %v742, %v950
        %v1071 = vsel %vm606, %v749, %v957
        %v1072 = vsel %vm606, %v755, %v963
        %v1073 = vsel %vm606, %v762, %v970
        %v1074 = vsel %vm606, %v768, %v976
        %v1075 = vsel %vm606, %v775, %v983
        %v1076 = vsel %vm606, %v781, %v989
        %v1077 = vsel %vm606, %v788, %v996
        %v1078 = vsel %vm606, %v794, %v1002
        %v1079 = vsel %vm606, %v801, %v1009
        %v1080 = vsel %vm606, %v807, %v1015
        %v1081 = vsel %vm606, %v814, %v1022
        %v1082 = vsel %vm606, %v820, %v1028
        %v1083 = vsel %vm606, %v827, %v1035
        %v1084 = vsel %vm606, %v833, %v1041
        %v1085 = vsel %vm606, %v840, %v1048
        %v1086 = vsel %vm606, %v846, %v1054
        %v1087 = vrot.slane %v611, 4
        %vm1088 = vcmask 1047556
        %v1089 = vsel %vm1088, %v1087, %v607
        %v1090 = vrot.slane %v607, 4
        %v1091 = vsel %vm1088, %v611, %v1090
        %v1093 = vunpack.c.l.s4 1983009808
        %v1094 = vunpack.c.0.s8 %v1093
        %v1095 = vperm.slane %v1089, %v1094
        %v1097 = vunpack.c.l.s4 1983009808
        %v1098 = vunpack.c.0.s8 %v1097
        %v1099 = vperm.slane %v1091, %v1098
        %v1100 = vrot.slane %v613, 4
        %v1101 = vsel %vm1088, %v1100, %v609
        %v1102 = vrot.slane %v609, 4
        %v1103 = vsel %vm1088, %v613, %v1102
        %v1105 = vunpack.c.l.s4 1983009808
        %v1106 = vunpack.c.0.s8 %v1105
        %v1107 = vperm.slane %v1101, %v1106
        %v1109 = vunpack.c.l.s4 1983009808
        %v1110 = vunpack.c.0.s8 %v1109
        %v1111 = vperm.slane %v1103, %v1110
        %v1112 = vrot.slane %v619, 4
        %v1113 = vsel %vm1088, %v1112, %v615
        %v1114 = vrot.slane %v615, 4
        %v1115 = vsel %vm1088, %v619, %v1114
        %v1117 = vunpack.c.l.s4 1983009808
        %v1118 = vunpack.c.0.s8 %v1117
        %v1119 = vperm.slane %v1113, %v1118
        %v1121 = vunpack.c.l.s4 1983009808
        %v1122 = vunpack.c.0.s8 %v1121
        %v1123 = vperm.slane %v1115, %v1122
        %v1124 = vrot.slane %v621, 4
        %v1125 = vsel %vm1088, %v1124, %v617
        %v1126 = vrot.slane %v617, 4
        %v1127 = vsel %vm1088, %v621, %v1126
        %v1129 = vunpack.c.l.s4 1983009808
        %v1130 = vunpack.c.0.s8 %v1129
        %v1131 = vperm.slane %v1125, %v1130
        %v1133 = vunpack.c.l.s4 1983009808
        %v1134 = vunpack.c.0.s8 %v1133
        %v1135 = vperm.slane %v1127, %v1134
        %v1136 = vrot.slane %v1107, 4
        %v1137 = vsel %vm1088, %v1136, %v1095
        %v1138 = vrot.slane %v1095, 4
        %v1139 = vsel %vm1088, %v1107, %v1138
        %v1141 = vunpack.c.l.s4 1934713408
        %v1142 = vunpack.c.0.s8 %v1141
        %v1143 = vperm.slane %v1137, %v1142
        %v1145 = vunpack.c.l.s4 1934713408
        %v1146 = vunpack.c.0.s8 %v1145
        %v1147 = vperm.slane %v1139, %v1146
        %v1148 = vrot.slane %v1111, 4
        %v1149 = vsel %vm1088, %v1148, %v1099
        %v1150 = vrot.slane %v1099, 4
        %v1151 = vsel %vm1088, %v1111, %v1150
        %v1153 = vunpack.c.l.s4 1934713408
        %v1154 = vunpack.c.0.s8 %v1153
        %v1155 = vperm.slane %v1149, %v1154
        %v1157 = vunpack.c.l.s4 1934713408
        %v1158 = vunpack.c.0.s8 %v1157
        %v1159 = vperm.slane %v1151, %v1158
        %v1160 = vrot.slane %v1131, 4
        %v1161 = vsel %vm1088, %v1160, %v1119
        %v1162 = vrot.slane %v1119, 4
        %v1163 = vsel %vm1088, %v1131, %v1162
        %v1165 = vunpack.c.l.s4 1934713408
        %v1166 = vunpack.c.0.s8 %v1165
        %v1167 = vperm.slane %v1161, %v1166
        %v1169 = vunpack.c.l.s4 1934713408
        %v1170 = vunpack.c.0.s8 %v1169
        %v1171 = vperm.slane %v1163, %v1170
        %v1172 = vrot.slane %v1135, 4
        %v1173 = vsel %vm1088, %v1172, %v1123
        %v1174 = vrot.slane %v1123, 4
        %v1175 = vsel %vm1088, %v1135, %v1174
        %v1177 = vunpack.c.l.s4 1934713408
        %v1178 = vunpack.c.0.s8 %v1177
        %v1179 = vperm.slane %v1173, %v1178
        %v1181 = vunpack.c.l.s4 1934713408
        %v1182 = vunpack.c.0.s8 %v1181
        %v1183 = vperm.slane %v1175, %v1182
        %v1184 = vrot.slane %v1167, 4
        %v1185 = vsel %vm1088, %v1184, %v1143
        %v1186 = vrot.slane %v1143, 4
        %v1187 = vsel %vm1088, %v1167, %v1186
        %v1188 = vrot.slane %v1171, 4
        %v1189 = vsel %vm1088, %v1188, %v1147
        %v1190 = vrot.slane %v1147, 4
        %v1191 = vsel %vm1088, %v1171, %v1190
        %v1192 = vrot.slane %v1179, 4
        %v1193 = vsel %vm1088, %v1192, %v1155
        %v1194 = vrot.slane %v1155, 4
        %v1195 = vsel %vm1088, %v1179, %v1194
        %v1196 = vrot.slane %v1183, 4
        %v1197 = vsel %vm1088, %v1196, %v1159
        %v1198 = vrot.slane %v1159, 4
        %v1199 = vsel %vm1088, %v1183, %v1198
        %v1200 = vrot.slane %v627, 4
        %v1201 = vsel %vm1088, %v1200, %v623
        %v1202 = vrot.slane %v623, 4
        %v1203 = vsel %vm1088, %v627, %v1202
        %v1205 = vunpack.c.l.s4 1983009808
        %v1206 = vunpack.c.0.s8 %v1205
        %v1207 = vperm.slane %v1201, %v1206
        %v1209 = vunpack.c.l.s4 1983009808
        %v1210 = vunpack.c.0.s8 %v1209
        %v1211 = vperm.slane %v1203, %v1210
        %v1212 = vrot.slane %v629, 4
        %v1213 = vsel %vm1088, %v1212, %v625
        %v1214 = vrot.slane %v625, 4
        %v1215 = vsel %vm1088, %v629, %v1214
        %v1217 = vunpack.c.l.s4 1983009808
        %v1218 = vunpack.c.0.s8 %v1217
        %v1219 = vperm.slane %v1213, %v1218
        %v1221 = vunpack.c.l.s4 1983009808
        %v1222 = vunpack.c.0.s8 %v1221
        %v1223 = vperm.slane %v1215, %v1222
        %v1224 = vrot.slane %v635, 4
        %v1225 = vsel %vm1088, %v1224, %v631
        %v1226 = vrot.slane %v631, 4
        %v1227 = vsel %vm1088, %v635, %v1226
        %v1229 = vunpack.c.l.s4 1983009808
        %v1230 = vunpack.c.0.s8 %v1229
        %v1231 = vperm.slane %v1225, %v1230
        %v1233 = vunpack.c.l.s4 1983009808
        %v1234 = vunpack.c.0.s8 %v1233
        %v1235 = vperm.slane %v1227, %v1234
        %v1236 = vrot.slane %v637, 4
        %v1237 = vsel %vm1088, %v1236, %v633
        %v1238 = vrot.slane %v633, 4
        %v1239 = vsel %vm1088, %v637, %v1238
        %v1241 = vunpack.c.l.s4 1983009808
        %v1242 = vunpack.c.0.s8 %v1241
        %v1243 = vperm.slane %v1237, %v1242
        %v1245 = vunpack.c.l.s4 1983009808
        %v1246 = vunpack.c.0.s8 %v1245
        %v1247 = vperm.slane %v1239, %v1246
        %v1248 = vrot.slane %v1219, 4
        %v1249 = vsel %vm1088, %v1248, %v1207
        %v1250 = vrot.slane %v1207, 4
        %v1251 = vsel %vm1088, %v1219, %v1250
        %v1253 = vunpack.c.l.s4 1934713408
        %v1254 = vunpack.c.0.s8 %v1253
        %v1255 = vperm.slane %v1249, %v1254
        %v1257 = vunpack.c.l.s4 1934713408
        %v1258 = vunpack.c.0.s8 %v1257
        %v1259 = vperm.slane %v1251, %v1258
        %v1260 = vrot.slane %v1223, 4
        %v1261 = vsel %vm1088, %v1260, %v1211
        %v1262 = vrot.slane %v1211, 4
        %v1263 = vsel %vm1088, %v1223, %v1262
        %v1265 = vunpack.c.l.s4 1934713408
        %v1266 = vunpack.c.0.s8 %v1265
        %v1267 = vperm.slane %v1261, %v1266
        %v1269 = vunpack.c.l.s4 1934713408
        %v1270 = vunpack.c.0.s8 %v1269
        %v1271 = vperm.slane %v1263, %v1270
        %v1272 = vrot.slane %v1243, 4
        %v1273 = vsel %vm1088, %v1272, %v1231
        %v1274 = vrot.slane %v1231, 4
        %v1275 = vsel %vm1088, %v1243, %v1274
        %v1277 = vunpack.c.l.s4 1934713408
        %v1278 = vunpack.c.0.s8 %v1277
        %v1279 = vperm.slane %v1273, %v1278
        %v1281 = vunpack.c.l.s4 1934713408
        %v1282 = vunpack.c.0.s8 %v1281
        %v1283 = vperm.slane %v1275, %v1282
        %v1284 = vrot.slane %v1247, 4
        %v1285 = vsel %vm1088, %v1284, %v1235
        %v1286 = vrot.slane %v1235, 4
        %v1287 = vsel %vm1088, %v1247, %v1286
        %v1289 = vunpack.c.l.s4 1934713408
        %v1290 = vunpack.c.0.s8 %v1289
        %v1291 = vperm.slane %v1285, %v1290
        %v1293 = vunpack.c.l.s4 1934713408
        %v1294 = vunpack.c.0.s8 %v1293
        %v1295 = vperm.slane %v1287, %v1294
        %v1296 = vrot.slane %v1279, 4
        %v1297 = vsel %vm1088, %v1296, %v1255
        %v1298 = vrot.slane %v1255, 4
        %v1299 = vsel %vm1088, %v1279, %v1298
        %v1300 = vrot.slane %v1283, 4
        %v1301 = vsel %vm1088, %v1300, %v1259
        %v1302 = vrot.slane %v1259, 4
        %v1303 = vsel %vm1088, %v1283, %v1302
        %v1304 = vrot.slane %v1291, 4
        %v1305 = vsel %vm1088, %v1304, %v1267
        %v1306 = vrot.slane %v1267, 4
        %v1307 = vsel %vm1088, %v1291, %v1306
        %v1308 = vrot.slane %v1295, 4
        %v1309 = vsel %vm1088, %v1308, %v1271
        %v1310 = vrot.slane %v1271, 4
        %v1311 = vsel %vm1088, %v1295, %v1310
        %v1312 = vrot.slane %v612, 4
        %v1313 = vsel %vm1088, %v1312, %v608
        %v1314 = vrot.slane %v608, 4
        %v1315 = vsel %vm1088, %v612, %v1314
        %v1317 = vunpack.c.l.s4 1983009808
        %v1318 = vunpack.c.0.s8 %v1317
        %v1319 = vperm.slane %v1313, %v1318
        %v1321 = vunpack.c.l.s4 1983009808
        %v1322 = vunpack.c.0.s8 %v1321
        %v1323 = vperm.slane %v1315, %v1322
        %v1324 = vrot.slane %v614, 4
        %v1325 = vsel %vm1088, %v1324, %v610
        %v1326 = vrot.slane %v610, 4
        %v1327 = vsel %vm1088, %v614, %v1326
        %v1329 = vunpack.c.l.s4 1983009808
        %v1330 = vunpack.c.0.s8 %v1329
        %v1331 = vperm.slane %v1325, %v1330
        %v1333 = vunpack.c.l.s4 1983009808
        %v1334 = vunpack.c.0.s8 %v1333
        %v1335 = vperm.slane %v1327, %v1334
        %v1336 = vrot.slane %v620, 4
        %v1337 = vsel %vm1088, %v1336, %v616
        %v1338 = vrot.slane %v616, 4
        %v1339 = vsel %vm1088, %v620, %v1338
        %v1341 = vunpack.c.l.s4 1983009808
        %v1342 = vunpack.c.0.s8 %v1341
        %v1343 = vperm.slane %v1337, %v1342
        %v1345 = vunpack.c.l.s4 1983009808
        %v1346 = vunpack.c.0.s8 %v1345
        %v1347 = vperm.slane %v1339, %v1346
        %v1348 = vrot.slane %v622, 4
        %v1349 = vsel %vm1088, %v1348, %v618
        %v1350 = vrot.slane %v618, 4
        %v1351 = vsel %vm1088, %v622, %v1350
        %v1353 = vunpack.c.l.s4 1983009808
        %v1354 = vunpack.c.0.s8 %v1353
        %v1355 = vperm.slane %v1349, %v1354
        %v1357 = vunpack.c.l.s4 1983009808
        %v1358 = vunpack.c.0.s8 %v1357
        %v1359 = vperm.slane %v1351, %v1358
        %v1360 = vrot.slane %v1331, 4
        %v1361 = vsel %vm1088, %v1360, %v1319
        %v1362 = vrot.slane %v1319, 4
        %v1363 = vsel %vm1088, %v1331, %v1362
        %v1365 = vunpack.c.l.s4 1934713408
        %v1366 = vunpack.c.0.s8 %v1365
        %v1367 = vperm.slane %v1361, %v1366
        %v1369 = vunpack.c.l.s4 1934713408
        %v1370 = vunpack.c.0.s8 %v1369
        %v1371 = vperm.slane %v1363, %v1370
        %v1372 = vrot.slane %v1335, 4
        %v1373 = vsel %vm1088, %v1372, %v1323
        %v1374 = vrot.slane %v1323, 4
        %v1375 = vsel %vm1088, %v1335, %v1374
        %v1377 = vunpack.c.l.s4 1934713408
        %v1378 = vunpack.c.0.s8 %v1377
        %v1379 = vperm.slane %v1373, %v1378
        %v1381 = vunpack.c.l.s4 1934713408
        %v1382 = vunpack.c.0.s8 %v1381
        %v1383 = vperm.slane %v1375, %v1382
        %v1384 = vrot.slane %v1355, 4
        %v1385 = vsel %vm1088, %v1384, %v1343
        %v1386 = vrot.slane %v1343, 4
        %v1387 = vsel %vm1088, %v1355, %v1386
        %v1389 = vunpack.c.l.s4 1934713408
        %v1390 = vunpack.c.0.s8 %v1389
        %v1391 = vperm.slane %v1385, %v1390
        %v1393 = vunpack.c.l.s4 1934713408
        %v1394 = vunpack.c.0.s8 %v1393
        %v1395 = vperm.slane %v1387, %v1394
        %v1396 = vrot.slane %v1359, 4
        %v1397 = vsel %vm1088, %v1396, %v1347
        %v1398 = vrot.slane %v1347, 4
        %v1399 = vsel %vm1088, %v1359, %v1398
        %v1401 = vunpack.c.l.s4 1934713408
        %v1402 = vunpack.c.0.s8 %v1401
        %v1403 = vperm.slane %v1397, %v1402
        %v1405 = vunpack.c.l.s4 1934713408
        %v1406 = vunpack.c.0.s8 %v1405
        %v1407 = vperm.slane %v1399, %v1406
        %v1408 = vrot.slane %v1391, 4
        %v1409 = vsel %vm1088, %v1408, %v1367
        %v1410 = vrot.slane %v1367, 4
        %v1411 = vsel %vm1088, %v1391, %v1410
        %v1412 = vrot.slane %v1395, 4
        %v1413 = vsel %vm1088, %v1412, %v1371
        %v1414 = vrot.slane %v1371, 4
        %v1415 = vsel %vm1088, %v1395, %v1414
        %v1416 = vrot.slane %v1403, 4
        %v1417 = vsel %vm1088, %v1416, %v1379
        %v1418 = vrot.slane %v1379, 4
        %v1419 = vsel %vm1088, %v1403, %v1418
        %v1420 = vrot.slane %v1407, 4
        %v1421 = vsel %vm1088, %v1420, %v1383
        %v1422 = vrot.slane %v1383, 4
        %v1423 = vsel %vm1088, %v1407, %v1422
        %v1424 = vrot.slane %v628, 4
        %v1425 = vsel %vm1088, %v1424, %v624
        %v1426 = vrot.slane %v624, 4
        %v1427 = vsel %vm1088, %v628, %v1426
        %v1429 = vunpack.c.l.s4 1983009808
        %v1430 = vunpack.c.0.s8 %v1429
        %v1431 = vperm.slane %v1425, %v1430
        %v1433 = vunpack.c.l.s4 1983009808
        %v1434 = vunpack.c.0.s8 %v1433
        %v1435 = vperm.slane %v1427, %v1434
        %v1436 = vrot.slane %v630, 4
        %v1437 = vsel %vm1088, %v1436, %v626
        %v1438 = vrot.slane %v626, 4
        %v1439 = vsel %vm1088, %v630, %v1438
        %v1441 = vunpack.c.l.s4 1983009808
        %v1442 = vunpack.c.0.s8 %v1441
        %v1443 = vperm.slane %v1437, %v1442
        %v1445 = vunpack.c.l.s4 1983009808
        %v1446 = vunpack.c.0.s8 %v1445
        %v1447 = vperm.slane %v1439, %v1446
        %v1448 = vrot.slane %v636, 4
        %v1449 = vsel %vm1088, %v1448, %v632
        %v1450 = vrot.slane %v632, 4
        %v1451 = vsel %vm1088, %v636, %v1450
        %v1453 = vunpack.c.l.s4 1983009808
        %v1454 = vunpack.c.0.s8 %v1453
        %v1455 = vperm.slane %v1449, %v1454
        %v1457 = vunpack.c.l.s4 1983009808
        %v1458 = vunpack.c.0.s8 %v1457
        %v1459 = vperm.slane %v1451, %v1458
        %v1460 = vrot.slane %v638, 4
        %v1461 = vsel %vm1088, %v1460, %v634
        %v1462 = vrot.slane %v634, 4
        %v1463 = vsel %vm1088, %v638, %v1462
        %v1465 = vunpack.c.l.s4 1983009808
        %v1466 = vunpack.c.0.s8 %v1465
        %v1467 = vperm.slane %v1461, %v1466
        %v1469 = vunpack.c.l.s4 1983009808
        %v1470 = vunpack.c.0.s8 %v1469
        %v1471 = vperm.slane %v1463, %v1470
        %v1472 = vrot.slane %v1443, 4
        %v1473 = vsel %vm1088, %v1472, %v1431
        %v1474 = vrot.slane %v1431, 4
        %v1475 = vsel %vm1088, %v1443, %v1474
        %v1477 = vunpack.c.l.s4 1934713408
        %v1478 = vunpack.c.0.s8 %v1477
        %v1479 = vperm.slane %v1473, %v1478
        %v1481 = vunpack.c.l.s4 1934713408
        %v1482 = vunpack.c.0.s8 %v1481
        %v1483 = vperm.slane %v1475, %v1482
        %v1484 = vrot.slane %v1447, 4
        %v1485 = vsel %vm1088, %v1484, %v1435
        %v1486 = vrot.slane %v1435, 4
        %v1487 = vsel %vm1088, %v1447, %v1486
        %v1489 = vunpack.c.l.s4 1934713408
        %v1490 = vunpack.c.0.s8 %v1489
        %v1491 = vperm.slane %v1485, %v1490
        %v1493 = vunpack.c.l.s4 1934713408
        %v1494 = vunpack.c.0.s8 %v1493
        %v1495 = vperm.slane %v1487, %v1494
        %v1496 = vrot.slane %v1467, 4
        %v1497 = vsel %vm1088, %v1496, %v1455
        %v1498 = vrot.slane %v1455, 4
        %v1499 = vsel %vm1088, %v1467, %v1498
        %v1501 = vunpack.c.l.s4 1934713408
        %v1502 = vunpack.c.0.s8 %v1501
        %v1503 = vperm.slane %v1497, %v1502
        %v1505 = vunpack.c.l.s4 1934713408
        %v1506 = vunpack.c.0.s8 %v1505
        %v1507 = vperm.slane %v1499, %v1506
        %v1508 = vrot.slane %v1471, 4
        %v1509 = vsel %vm1088, %v1508, %v1459
        %v1510 = vrot.slane %v1459, 4
        %v1511 = vsel %vm1088, %v1471, %v1510
        %v1513 = vunpack.c.l.s4 1934713408
        %v1514 = vunpack.c.0.s8 %v1513
        %v1515 = vperm.slane %v1509, %v1514
        %v1517 = vunpack.c.l.s4 1934713408
        %v1518 = vunpack.c.0.s8 %v1517
        %v1519 = vperm.slane %v1511, %v1518
        %v1520 = vrot.slane %v1503, 4
        %v1521 = vsel %vm1088, %v1520, %v1479
        %v1522 = vrot.slane %v1479, 4
        %v1523 = vsel %vm1088, %v1503, %v1522
        %v1524 = vrot.slane %v1507, 4
        %v1525 = vsel %vm1088, %v1524, %v1483
        %v1526 = vrot.slane %v1483, 4
        %v1527 = vsel %vm1088, %v1507, %v1526
        %v1528 = vrot.slane %v1515, 4
        %v1529 = vsel %vm1088, %v1528, %v1491
        %v1530 = vrot.slane %v1491, 4
        %v1531 = vsel %vm1088, %v1515, %v1530
        %v1532 = vrot.slane %v1519, 4
        %v1533 = vsel %vm1088, %v1532, %v1495
        %v1534 = vrot.slane %v1495, 4
        %v1535 = vsel %vm1088, %v1519, %v1534
        %1538 = vrot.lane.b32.xlu0 %v1187, 2
        %v1539 = vpop.permute.xlu0 %1538
        %1540 = vrot.lane.b32.xlu0 %v1299, 2
        %v1541 = vpop.permute.xlu0 %1540
        %1546 = vrot.lane.b32.xlu0 %v1189, 4
        %v1547 = vpop.permute.xlu0 %1546
        %1548 = vrot.lane.b32.xlu0 %v1301, 4
        %v1549 = vpop.permute.xlu0 %1548
        %1554 = vrot.lane.b32.xlu0 %v1191, 6
        %v1555 = vpop.permute.xlu0 %1554
        %1556 = vrot.lane.b32.xlu0 %v1303, 6
        %v1557 = vpop.permute.xlu0 %1556
        %1562 = vrot.lane.b32.xlu0 %v1193, 8
        %v1563 = vpop.permute.xlu0 %1562
        %1564 = vrot.lane.b32.xlu0 %v1305, 8
        %v1565 = vpop.permute.xlu0 %1564
        %1570 = vrot.lane.b32.xlu0 %v1195, 10
        %v1571 = vpop.permute.xlu0 %1570
        %1572 = vrot.lane.b32.xlu0 %v1307, 10
        %v1573 = vpop.permute.xlu0 %1572
        %1578 = vrot.lane.b32.xlu0 %v1197, 12
        %v1579 = vpop.permute.xlu0 %1578
        %1580 = vrot.lane.b32.xlu0 %v1309, 12
        %v1581 = vpop.permute.xlu0 %1580
        %1586 = vrot.lane.b32.xlu0 %v1199, 14
        %v1587 = vpop.permute.xlu0 %1586
        %1588 = vrot.lane.b32.xlu0 %v1311, 14
        %v1589 = vpop.permute.xlu0 %1588
        %1594 = vrot.lane.b32.xlu0 %v1409, 16
        %v1595 = vpop.permute.xlu0 %1594
        %1596 = vrot.lane.b32.xlu0 %v1521, 16
        %v1597 = vpop.permute.xlu0 %1596
        %1602 = vrot.lane.b32.xlu0 %v1411, 18
        %v1603 = vpop.permute.xlu0 %1602
        %1604 = vrot.lane.b32.xlu0 %v1523, 18
        %v1605 = vpop.permute.xlu0 %1604
        %1610 = vrot.lane.b32.xlu0 %v1413, 20
        %v1611 = vpop.permute.xlu0 %1610
        %1612 = vrot.lane.b32.xlu0 %v1525, 20
        %v1613 = vpop.permute.xlu0 %1612
        %1618 = vrot.lane.b32.xlu0 %v1415, 22
        %v1619 = vpop.permute.xlu0 %1618
        %1620 = vrot.lane.b32.xlu0 %v1527, 22
        %v1621 = vpop.permute.xlu0 %1620
        %1626 = vrot.lane.b32.xlu0 %v1417, 24
        %v1627 = vpop.permute.xlu0 %1626
        %1628 = vrot.lane.b32.xlu0 %v1529, 24
        %v1629 = vpop.permute.xlu0 %1628
        %1634 = vrot.lane.b32.xlu0 %v1419, 26
        %v1635 = vpop.permute.xlu0 %1634
        %1636 = vrot.lane.b32.xlu0 %v1531, 26
        %v1637 = vpop.permute.xlu0 %1636
        %1642 = vrot.lane.b32.xlu0 %v1421, 28
        %v1643 = vpop.permute.xlu0 %1642
        %1644 = vrot.lane.b32.xlu0 %v1533, 28
        %v1645 = vpop.permute.xlu0 %1644
        %1650 = vrot.lane.b32.xlu0 %v1423, 30
        %v1651 = vpop.permute.xlu0 %1650
        %1652 = vrot.lane.b32.xlu0 %v1535, 30
        %v1653 = vpop.permute.xlu0 %1652
        %vm1656 = vcmask 15360
        %v1657 = vsel %vm1656, %v1185, %v1539
        %v1658 = vsel %vm1656, %v1297, %v1541
        %vm1659 = vcmask 31744
        %v1660 = vsel %vm1659, %v1657, %v1547
        %v1661 = vsel %vm1659, %v1658, %v1549
        %vm1662 = vcmask 48128
        %v1663 = vsel %vm1662, %v1660, %v1555
        %v1664 = vsel %vm1662, %v1661, %v1557
        %vm1665 = vcmask 64512
        %v1666 = vsel %vm1665, %v1663, %v1563
        %v1667 = vsel %vm1665, %v1664, %v1565
        %vm1668 = vcmask 80896
        %v1669 = vsel %vm1668, %v1666, %v1571
        %v1670 = vsel %vm1668, %v1667, %v1573
        %vm1671 = vcmask 97280
        %v1672 = vsel %vm1671, %v1669, %v1579
        %v1673 = vsel %vm1671, %v1670, %v1581
        %vm1674 = vcmask 113664
        %v1675 = vsel %vm1674, %v1672, %v1587
        %v1676 = vsel %vm1674, %v1673, %v1589
        %vm1677 = vcmask 130048
        %v1678 = vsel %vm1677, %v1675, %v1595
        %v1679 = vsel %vm1677, %v1676, %v1597
        %vm1680 = vcmask 146432
        %v1681 = vsel %vm1680, %v1678, %v1603
        %v1682 = vsel %vm1680, %v1679, %v1605
        %vm1683 = vcmask 162816
        %v1684 = vsel %vm1683, %v1681, %v1611
        %v1685 = vsel %vm1683, %v1682, %v1613
        %vm1686 = vcmask 179200
        %v1687 = vsel %vm1686, %v1684, %v1619
        %v1688 = vsel %vm1686, %v1685, %v1621
        %vm1689 = vcmask 195584
        %v1690 = vsel %vm1689, %v1687, %v1627
        %v1691 = vsel %vm1689, %v1688, %v1629
        %vm1692 = vcmask 211968
        %v1693 = vsel %vm1692, %v1690, %v1635
        %v1694 = vsel %vm1692, %v1691, %v1637
        %vm1695 = vcmask 228352
        %v1696 = vsel %vm1695, %v1693, %v1643
        %v1697 = vsel %vm1695, %v1694, %v1645
        %vm1698 = vcmask 244736
        %v1699 = vsel %vm1698, %v1696, %v1651
        %v1700 = vsel %vm1698, %v1697, %v1653
        %vm1701 = vcmask 261120
        %1702 = vst.msk [vmem:[%s154] sm:$0xff] %vm1701, %v1699
        %1703 = vst.msk [vmem:[%s154 + $0x8] sm:$0xff] %vm1701, %v1700
        %v1704 = vrot.slane %v1059, 4
        %v1705 = vsel %vm1088, %v1704, %v1055
        %v1706 = vrot.slane %v1055, 4
        %v1707 = vsel %vm1088, %v1059, %v1706
        %v1709 = vunpack.c.l.s4 1983009808
        %v1710 = vunpack.c.0.s8 %v1709
        %v1711 = vperm.slane %v1705, %v1710
        %v1713 = vunpack.c.l.s4 1983009808
        %v1714 = vunpack.c.0.s8 %v1713
        %v1715 = vperm.slane %v1707, %v1714
        %v1716 = vrot.slane %v1061, 4
        %v1717 = vsel %vm1088, %v1716, %v1057
        %v1718 = vrot.slane %v1057, 4
        %v1719 = vsel %vm1088, %v1061, %v1718
        %v1721 = vunpack.c.l.s4 1983009808
        %v1722 = vunpack.c.0.s8 %v1721
        %v1723 = vperm.slane %v1717, %v1722
        %v1725 = vunpack.c.l.s4 1983009808
        %v1726 = vunpack.c.0.s8 %v1725
        %v1727 = vperm.slane %v1719, %v1726
        %v1728 = vrot.slane %v1067, 4
        %v1729 = vsel %vm1088, %v1728, %v1063
        %v1730 = vrot.slane %v1063, 4
        %v1731 = vsel %vm1088, %v1067, %v1730
        %v1733 = vunpack.c.l.s4 1983009808
        %v1734 = vunpack.c.0.s8 %v1733
        %v1735 = vperm.slane %v1729, %v1734
        %v1737 = vunpack.c.l.s4 1983009808
        %v1738 = vunpack.c.0.s8 %v1737
        %v1739 = vperm.slane %v1731, %v1738
        %v1740 = vrot.slane %v1069, 4
        %v1741 = vsel %vm1088, %v1740, %v1065
        %v1742 = vrot.slane %v1065, 4
        %v1743 = vsel %vm1088, %v1069, %v1742
        %v1745 = vunpack.c.l.s4 1983009808
        %v1746 = vunpack.c.0.s8 %v1745
        %v1747 = vperm.slane %v1741, %v1746
        %v1749 = vunpack.c.l.s4 1983009808
        %v1750 = vunpack.c.0.s8 %v1749
        %v1751 = vperm.slane %v1743, %v1750
        %v1752 = vrot.slane %v1723, 4
        %v1753 = vsel %vm1088, %v1752, %v1711
        %v1754 = vrot.slane %v1711, 4
        %v1755 = vsel %vm1088, %v1723, %v1754
        %v1757 = vunpack.c.l.s4 1934713408
        %v1758 = vunpack.c.0.s8 %v1757
        %v1759 = vperm.slane %v1753, %v1758
        %v1761 = vunpack.c.l.s4 1934713408
        %v1762 = vunpack.c.0.s8 %v1761
        %v1763 = vperm.slane %v1755, %v1762
        %v1764 = vrot.slane %v1727, 4
        %v1765 = vsel %vm1088, %v1764, %v1715
        %v1766 = vrot.slane %v1715, 4
        %v1767 = vsel %vm1088, %v1727, %v1766
        %v1769 = vunpack.c.l.s4 1934713408
        %v1770 = vunpack.c.0.s8 %v1769
        %v1771 = vperm.slane %v1765, %v1770
        %v1773 = vunpack.c.l.s4 1934713408
        %v1774 = vunpack.c.0.s8 %v1773
        %v1775 = vperm.slane %v1767, %v1774
        %v1776 = vrot.slane %v1747, 4
        %v1777 = vsel %vm1088, %v1776, %v1735
        %v1778 = vrot.slane %v1735, 4
        %v1779 = vsel %vm1088, %v1747, %v1778
        %v1781 = vunpack.c.l.s4 1934713408
        %v1782 = vunpack.c.0.s8 %v1781
        %v1783 = vperm.slane %v1777, %v1782
        %v1785 = vunpack.c.l.s4 1934713408
        %v1786 = vunpack.c.0.s8 %v1785
        %v1787 = vperm.slane %v1779, %v1786
        %v1788 = vrot.slane %v1751, 4
        %v1789 = vsel %vm1088, %v1788, %v1739
        %v1790 = vrot.slane %v1739, 4
        %v1791 = vsel %vm1088, %v1751, %v1790
        %v1793 = vunpack.c.l.s4 1934713408
        %v1794 = vunpack.c.0.s8 %v1793
        %v1795 = vperm.slane %v1789, %v1794
        %v1797 = vunpack.c.l.s4 1934713408
        %v1798 = vunpack.c.0.s8 %v1797
        %v1799 = vperm.slane %v1791, %v1798
        %v1800 = vrot.slane %v1783, 4
        %v1801 = vsel %vm1088, %v1800, %v1759
        %v1802 = vrot.slane %v1759, 4
        %v1803 = vsel %vm1088, %v1783, %v1802
        %v1804 = vrot.slane %v1787, 4
        %v1805 = vsel %vm1088, %v1804, %v1763
        %v1806 = vrot.slane %v1763, 4
        %v1807 = vsel %vm1088, %v1787, %v1806
        %v1808 = vrot.slane %v1795, 4
        %v1809 = vsel %vm1088, %v1808, %v1771
        %v1810 = vrot.slane %v1771, 4
        %v1811 = vsel %vm1088, %v1795, %v1810
        %v1812 = vrot.slane %v1799, 4
        %v1813 = vsel %vm1088, %v1812, %v1775
        %v1814 = vrot.slane %v1775, 4
        %v1815 = vsel %vm1088, %v1799, %v1814
        %v1816 = vrot.slane %v1075, 4
        %v1817 = vsel %vm1088, %v1816, %v1071
        %v1818 = vrot.slane %v1071, 4
        %v1819 = vsel %vm1088, %v1075, %v1818
        %v1821 = vunpack.c.l.s4 1983009808
        %v1822 = vunpack.c.0.s8 %v1821
        %v1823 = vperm.slane %v1817, %v1822
        %v1825 = vunpack.c.l.s4 1983009808
        %v1826 = vunpack.c.0.s8 %v1825
        %v1827 = vperm.slane %v1819, %v1826
        %v1828 = vrot.slane %v1077, 4
        %v1829 = vsel %vm1088, %v1828, %v1073
        %v1830 = vrot.slane %v1073, 4
        %v1831 = vsel %vm1088, %v1077, %v1830
        %v1833 = vunpack.c.l.s4 1983009808
        %v1834 = vunpack.c.0.s8 %v1833
        %v1835 = vperm.slane %v1829, %v1834
        %v1837 = vunpack.c.l.s4 1983009808
        %v1838 = vunpack.c.0.s8 %v1837
        %v1839 = vperm.slane %v1831, %v1838
        %v1840 = vrot.slane %v1083, 4
        %v1841 = vsel %vm1088, %v1840, %v1079
        %v1842 = vrot.slane %v1079, 4
        %v1843 = vsel %vm1088, %v1083, %v1842
        %v1845 = vunpack.c.l.s4 1983009808
        %v1846 = vunpack.c.0.s8 %v1845
        %v1847 = vperm.slane %v1841, %v1846
        %v1849 = vunpack.c.l.s4 1983009808
        %v1850 = vunpack.c.0.s8 %v1849
        %v1851 = vperm.slane %v1843, %v1850
        %v1852 = vrot.slane %v1085, 4
        %v1853 = vsel %vm1088, %v1852, %v1081
        %v1854 = vrot.slane %v1081, 4
        %v1855 = vsel %vm1088, %v1085, %v1854
        %v1857 = vunpack.c.l.s4 1983009808
        %v1858 = vunpack.c.0.s8 %v1857
        %v1859 = vperm.slane %v1853, %v1858
        %v1861 = vunpack.c.l.s4 1983009808
        %v1862 = vunpack.c.0.s8 %v1861
        %v1863 = vperm.slane %v1855, %v1862
        %v1864 = vrot.slane %v1835, 4
        %v1865 = vsel %vm1088, %v1864, %v1823
        %v1866 = vrot.slane %v1823, 4
        %v1867 = vsel %vm1088, %v1835, %v1866
        %v1869 = vunpack.c.l.s4 1934713408
        %v1870 = vunpack.c.0.s8 %v1869
        %v1871 = vperm.slane %v1865, %v1870
        %v1873 = vunpack.c.l.s4 1934713408
        %v1874 = vunpack.c.0.s8 %v1873
        %v1875 = vperm.slane %v1867, %v1874
        %v1876 = vrot.slane %v1839, 4
        %v1877 = vsel %vm1088, %v1876, %v1827
        %v1878 = vrot.slane %v1827, 4
        %v1879 = vsel %vm1088, %v1839, %v1878
        %v1881 = vunpack.c.l.s4 1934713408
        %v1882 = vunpack.c.0.s8 %v1881
        %v1883 = vperm.slane %v1877, %v1882
        %v1885 = vunpack.c.l.s4 1934713408
        %v1886 = vunpack.c.0.s8 %v1885
        %v1887 = vperm.slane %v1879, %v1886
        %v1888 = vrot.slane %v1859, 4
        %v1889 = vsel %vm1088, %v1888, %v1847
        %v1890 = vrot.slane %v1847, 4
        %v1891 = vsel %vm1088, %v1859, %v1890
        %v1893 = vunpack.c.l.s4 1934713408
        %v1894 = vunpack.c.0.s8 %v1893
        %v1895 = vperm.slane %v1889, %v1894
        %v1897 = vunpack.c.l.s4 1934713408
        %v1898 = vunpack.c.0.s8 %v1897
        %v1899 = vperm.slane %v1891, %v1898
        %v1900 = vrot.slane %v1863, 4
        %v1901 = vsel %vm1088, %v1900, %v1851
        %v1902 = vrot.slane %v1851, 4
        %v1903 = vsel %vm1088, %v1863, %v1902
        %v1905 = vunpack.c.l.s4 1934713408
        %v1906 = vunpack.c.0.s8 %v1905
        %v1907 = vperm.slane %v1901, %v1906
        %v1909 = vunpack.c.l.s4 1934713408
        %v1910 = vunpack.c.0.s8 %v1909
        %v1911 = vperm.slane %v1903, %v1910
        %v1912 = vrot.slane %v1895, 4
        %v1913 = vsel %vm1088, %v1912, %v1871
        %v1914 = vrot.slane %v1871, 4
        %v1915 = vsel %vm1088, %v1895, %v1914
        %v1916 = vrot.slane %v1899, 4
        %v1917 = vsel %vm1088, %v1916, %v1875
        %v1918 = vrot.slane %v1875, 4
        %v1919 = vsel %vm1088, %v1899, %v1918
        %v1920 = vrot.slane %v1907, 4
        %v1921 = vsel %vm1088, %v1920, %v1883
        %v1922 = vrot.slane %v1883, 4
        %v1923 = vsel %vm1088, %v1907, %v1922
        %v1924 = vrot.slane %v1911, 4
        %v1925 = vsel %vm1088, %v1924, %v1887
        %v1926 = vrot.slane %v1887, 4
        %v1927 = vsel %vm1088, %v1911, %v1926
        %v1928 = vrot.slane %v1060, 4
        %v1929 = vsel %vm1088, %v1928, %v1056
        %v1930 = vrot.slane %v1056, 4
        %v1931 = vsel %vm1088, %v1060, %v1930
        %v1933 = vunpack.c.l.s4 1983009808
        %v1934 = vunpack.c.0.s8 %v1933
        %v1935 = vperm.slane %v1929, %v1934
        %v1937 = vunpack.c.l.s4 1983009808
        %v1938 = vunpack.c.0.s8 %v1937
        %v1939 = vperm.slane %v1931, %v1938
        %v1940 = vrot.slane %v1062, 4
        %v1941 = vsel %vm1088, %v1940, %v1058
        %v1942 = vrot.slane %v1058, 4
        %v1943 = vsel %vm1088, %v1062, %v1942
        %v1945 = vunpack.c.l.s4 1983009808
        %v1946 = vunpack.c.0.s8 %v1945
        %v1947 = vperm.slane %v1941, %v1946
        %v1949 = vunpack.c.l.s4 1983009808
        %v1950 = vunpack.c.0.s8 %v1949
        %v1951 = vperm.slane %v1943, %v1950
        %v1952 = vrot.slane %v1068, 4
        %v1953 = vsel %vm1088, %v1952, %v1064
        %v1954 = vrot.slane %v1064, 4
        %v1955 = vsel %vm1088, %v1068, %v1954
        %v1957 = vunpack.c.l.s4 1983009808
        %v1958 = vunpack.c.0.s8 %v1957
        %v1959 = vperm.slane %v1953, %v1958
        %v1961 = vunpack.c.l.s4 1983009808
        %v1962 = vunpack.c.0.s8 %v1961
        %v1963 = vperm.slane %v1955, %v1962
        %v1964 = vrot.slane %v1070, 4
        %v1965 = vsel %vm1088, %v1964, %v1066
        %v1966 = vrot.slane %v1066, 4
        %v1967 = vsel %vm1088, %v1070, %v1966
        %v1969 = vunpack.c.l.s4 1983009808
        %v1970 = vunpack.c.0.s8 %v1969
        %v1971 = vperm.slane %v1965, %v1970
        %v1973 = vunpack.c.l.s4 1983009808
        %v1974 = vunpack.c.0.s8 %v1973
        %v1975 = vperm.slane %v1967, %v1974
        %v1976 = vrot.slane %v1947, 4
        %v1977 = vsel %vm1088, %v1976, %v1935
        %v1978 = vrot.slane %v1935, 4
        %v1979 = vsel %vm1088, %v1947, %v1978
        %v1981 = vunpack.c.l.s4 1934713408
        %v1982 = vunpack.c.0.s8 %v1981
        %v1983 = vperm.slane %v1977, %v1982
        %v1985 = vunpack.c.l.s4 1934713408
        %v1986 = vunpack.c.0.s8 %v1985
        %v1987 = vperm.slane %v1979, %v1986
        %v1988 = vrot.slane %v1951, 4
        %v1989 = vsel %vm1088, %v1988, %v1939
        %v1990 = vrot.slane %v1939, 4
        %v1991 = vsel %vm1088, %v1951, %v1990
        %v1993 = vunpack.c.l.s4 1934713408
        %v1994 = vunpack.c.0.s8 %v1993
        %v1995 = vperm.slane %v1989, %v1994
        %v1997 = vunpack.c.l.s4 1934713408
        %v1998 = vunpack.c.0.s8 %v1997
        %v1999 = vperm.slane %v1991, %v1998
        %v2000 = vrot.slane %v1971, 4
        %v2001 = vsel %vm1088, %v2000, %v1959
        %v2002 = vrot.slane %v1959, 4
        %v2003 = vsel %vm1088, %v1971, %v2002
        %v2005 = vunpack.c.l.s4 1934713408
        %v2006 = vunpack.c.0.s8 %v2005
        %v2007 = vperm.slane %v2001, %v2006
        %v2009 = vunpack.c.l.s4 1934713408
        %v2010 = vunpack.c.0.s8 %v2009
        %v2011 = vperm.slane %v2003, %v2010
        %v2012 = vrot.slane %v1975, 4
        %v2013 = vsel %vm1088, %v2012, %v1963
        %v2014 = vrot.slane %v1963, 4
        %v2015 = vsel %vm1088, %v1975, %v2014
        %v2017 = vunpack.c.l.s4 1934713408
        %v2018 = vunpack.c.0.s8 %v2017
        %v2019 = vperm.slane %v2013, %v2018
        %v2021 = vunpack.c.l.s4 1934713408
        %v2022 = vunpack.c.0.s8 %v2021
        %v2023 = vperm.slane %v2015, %v2022
        %v2024 = vrot.slane %v2007, 4
        %v2025 = vsel %vm1088, %v2024, %v1983
        %v2026 = vrot.slane %v1983, 4
        %v2027 = vsel %vm1088, %v2007, %v2026
        %v2028 = vrot.slane %v2011, 4
        %v2029 = vsel %vm1088, %v2028, %v1987
        %v2030 = vrot.slane %v1987, 4
        %v2031 = vsel %vm1088, %v2011, %v2030
        %v2032 = vrot.slane %v2019, 4
        %v2033 = vsel %vm1088, %v2032, %v1995
        %v2034 = vrot.slane %v1995, 4
        %v2035 = vsel %vm1088, %v2019, %v2034
        %v2036 = vrot.slane %v2023, 4
        %v2037 = vsel %vm1088, %v2036, %v1999
        %v2038 = vrot.slane %v1999, 4
        %v2039 = vsel %vm1088, %v2023, %v2038
        %v2040 = vrot.slane %v1076, 4
        %v2041 = vsel %vm1088, %v2040, %v1072
        %v2042 = vrot.slane %v1072, 4
        %v2043 = vsel %vm1088, %v1076, %v2042
        %v2045 = vunpack.c.l.s4 1983009808
        %v2046 = vunpack.c.0.s8 %v2045
        %v2047 = vperm.slane %v2041, %v2046
        %v2049 = vunpack.c.l.s4 1983009808
        %v2050 = vunpack.c.0.s8 %v2049
        %v2051 = vperm.slane %v2043, %v2050
        %v2052 = vrot.slane %v1078, 4
        %v2053 = vsel %vm1088, %v2052, %v1074
        %v2054 = vrot.slane %v1074, 4
        %v2055 = vsel %vm1088, %v1078, %v2054
        %v2057 = vunpack.c.l.s4 1983009808
        %v2058 = vunpack.c.0.s8 %v2057
        %v2059 = vperm.slane %v2053, %v2058
        %v2061 = vunpack.c.l.s4 1983009808
        %v2062 = vunpack.c.0.s8 %v2061
        %v2063 = vperm.slane %v2055, %v2062
        %v2064 = vrot.slane %v1084, 4
        %v2065 = vsel %vm1088, %v2064, %v1080
        %v2066 = vrot.slane %v1080, 4
        %v2067 = vsel %vm1088, %v1084, %v2066
        %v2069 = vunpack.c.l.s4 1983009808
        %v2070 = vunpack.c.0.s8 %v2069
        %v2071 = vperm.slane %v2065, %v2070
        %v2073 = vunpack.c.l.s4 1983009808
        %v2074 = vunpack.c.0.s8 %v2073
        %v2075 = vperm.slane %v2067, %v2074
        %v2076 = vrot.slane %v1086, 4
        %v2077 = vsel %vm1088, %v2076, %v1082
        %v2078 = vrot.slane %v1082, 4
        %v2079 = vsel %vm1088, %v1086, %v2078
        %v2081 = vunpack.c.l.s4 1983009808
        %v2082 = vunpack.c.0.s8 %v2081
        %v2083 = vperm.slane %v2077, %v2082
        %v2085 = vunpack.c.l.s4 1983009808
        %v2086 = vunpack.c.0.s8 %v2085
        %v2087 = vperm.slane %v2079, %v2086
        %v2088 = vrot.slane %v2059, 4
        %v2089 = vsel %vm1088, %v2088, %v2047
        %v2090 = vrot.slane %v2047, 4
        %v2091 = vsel %vm1088, %v2059, %v2090
        %v2093 = vunpack.c.l.s4 1934713408
        %v2094 = vunpack.c.0.s8 %v2093
        %v2095 = vperm.slane %v2089, %v2094
        %v2097 = vunpack.c.l.s4 1934713408
        %v2098 = vunpack.c.0.s8 %v2097
        %v2099 = vperm.slane %v2091, %v2098
        %v2100 = vrot.slane %v2063, 4
        %v2101 = vsel %vm1088, %v2100, %v2051
        %v2102 = vrot.slane %v2051, 4
        %v2103 = vsel %vm1088, %v2063, %v2102
        %v2105 = vunpack.c.l.s4 1934713408
        %v2106 = vunpack.c.0.s8 %v2105
        %v2107 = vperm.slane %v2101, %v2106
        %v2109 = vunpack.c.l.s4 1934713408
        %v2110 = vunpack.c.0.s8 %v2109
        %v2111 = vperm.slane %v2103, %v2110
        %v2112 = vrot.slane %v2083, 4
        %v2113 = vsel %vm1088, %v2112, %v2071
        %v2114 = vrot.slane %v2071, 4
        %v2115 = vsel %vm1088, %v2083, %v2114
        %v2117 = vunpack.c.l.s4 1934713408
        %v2118 = vunpack.c.0.s8 %v2117
        %v2119 = vperm.slane %v2113, %v2118
        %v2121 = vunpack.c.l.s4 1934713408
        %v2122 = vunpack.c.0.s8 %v2121
        %v2123 = vperm.slane %v2115, %v2122
        %v2124 = vrot.slane %v2087, 4
        %v2125 = vsel %vm1088, %v2124, %v2075
        %v2126 = vrot.slane %v2075, 4
        %v2127 = vsel %vm1088, %v2087, %v2126
        %v2129 = vunpack.c.l.s4 1934713408
        %v2130 = vunpack.c.0.s8 %v2129
        %v2131 = vperm.slane %v2125, %v2130
        %v2133 = vunpack.c.l.s4 1934713408
        %v2134 = vunpack.c.0.s8 %v2133
        %v2135 = vperm.slane %v2127, %v2134
        %v2136 = vrot.slane %v2119, 4
        %v2137 = vsel %vm1088, %v2136, %v2095
        %v2138 = vrot.slane %v2095, 4
        %v2139 = vsel %vm1088, %v2119, %v2138
        %v2140 = vrot.slane %v2123, 4
        %v2141 = vsel %vm1088, %v2140, %v2099
        %v2142 = vrot.slane %v2099, 4
        %v2143 = vsel %vm1088, %v2123, %v2142
        %v2144 = vrot.slane %v2131, 4
        %v2145 = vsel %vm1088, %v2144, %v2107
        %v2146 = vrot.slane %v2107, 4
        %v2147 = vsel %vm1088, %v2131, %v2146
        %v2148 = vrot.slane %v2135, 4
        %v2149 = vsel %vm1088, %v2148, %v2111
        %v2150 = vrot.slane %v2111, 4
        %v2151 = vsel %vm1088, %v2135, %v2150
        %2154 = vrot.lane.b32.xlu0 %v1803, 2
        %v2155 = vpop.permute.xlu0 %2154
        %2156 = vrot.lane.b32.xlu0 %v1915, 2
        %v2157 = vpop.permute.xlu0 %2156
        %2162 = vrot.lane.b32.xlu0 %v1805, 4
        %v2163 = vpop.permute.xlu0 %2162
        %2164 = vrot.lane.b32.xlu0 %v1917, 4
        %v2165 = vpop.permute.xlu0 %2164
        %2170 = vrot.lane.b32.xlu0 %v1807, 6
        %v2171 = vpop.permute.xlu0 %2170
        %2172 = vrot.lane.b32.xlu0 %v1919, 6
        %v2173 = vpop.permute.xlu0 %2172
        %2178 = vrot.lane.b32.xlu0 %v1809, 8
        %v2179 = vpop.permute.xlu0 %2178
        %2180 = vrot.lane.b32.xlu0 %v1921, 8
        %v2181 = vpop.permute.xlu0 %2180
        %2186 = vrot.lane.b32.xlu0 %v1811, 10
        %v2187 = vpop.permute.xlu0 %2186
        %2188 = vrot.lane.b32.xlu0 %v1923, 10
        %v2189 = vpop.permute.xlu0 %2188
        %2194 = vrot.lane.b32.xlu0 %v1813, 12
        %v2195 = vpop.permute.xlu0 %2194
        %2196 = vrot.lane.b32.xlu0 %v1925, 12
        %v2197 = vpop.permute.xlu0 %2196
        %2202 = vrot.lane.b32.xlu0 %v1815, 14
        %v2203 = vpop.permute.xlu0 %2202
        %2204 = vrot.lane.b32.xlu0 %v1927, 14
        %v2205 = vpop.permute.xlu0 %2204
        %2210 = vrot.lane.b32.xlu0 %v2025, 16
        %v2211 = vpop.permute.xlu0 %2210
        %2212 = vrot.lane.b32.xlu0 %v2137, 16
        %v2213 = vpop.permute.xlu0 %2212
        %2218 = vrot.lane.b32.xlu0 %v2027, 18
        %v2219 = vpop.permute.xlu0 %2218
        %2220 = vrot.lane.b32.xlu0 %v2139, 18
        %v2221 = vpop.permute.xlu0 %2220
        %2226 = vrot.lane.b32.xlu0 %v2029, 20
        %v2227 = vpop.permute.xlu0 %2226
        %2228 = vrot.lane.b32.xlu0 %v2141, 20
        %v2229 = vpop.permute.xlu0 %2228
        %2234 = vrot.lane.b32.xlu0 %v2031, 22
        %v2235 = vpop.permute.xlu0 %2234
        %2236 = vrot.lane.b32.xlu0 %v2143, 22
        %v2237 = vpop.permute.xlu0 %2236
        %2242 = vrot.lane.b32.xlu0 %v2033, 24
        %v2243 = vpop.permute.xlu0 %2242
        %2244 = vrot.lane.b32.xlu0 %v2145, 24
        %v2245 = vpop.permute.xlu0 %2244
        %2250 = vrot.lane.b32.xlu0 %v2035, 26
        %v2251 = vpop.permute.xlu0 %2250
        %2252 = vrot.lane.b32.xlu0 %v2147, 26
        %v2253 = vpop.permute.xlu0 %2252
        %2258 = vrot.lane.b32.xlu0 %v2037, 28
        %v2259 = vpop.permute.xlu0 %2258
        %2260 = vrot.lane.b32.xlu0 %v2149, 28
        %v2261 = vpop.permute.xlu0 %2260
        %2266 = vrot.lane.b32.xlu0 %v2039, 30
        %v2267 = vpop.permute.xlu0 %2266
        %2268 = vrot.lane.b32.xlu0 %v2151, 30
        %v2269 = vpop.permute.xlu0 %2268
        %v2272 = vsel %vm1656, %v1801, %v2155
        %v2273 = vsel %vm1656, %v1913, %v2157
        %v2274 = vsel %vm1659, %v2272, %v2163
        %v2275 = vsel %vm1659, %v2273, %v2165
        %v2276 = vsel %vm1662, %v2274, %v2171
        %v2277 = vsel %vm1662, %v2275, %v2173
        %v2278 = vsel %vm1665, %v2276, %v2179
        %v2279 = vsel %vm1665, %v2277, %v2181
        %v2280 = vsel %vm1668, %v2278, %v2187
        %v2281 = vsel %vm1668, %v2279, %v2189
        %v2282 = vsel %vm1671, %v2280, %v2195
        %v2283 = vsel %vm1671, %v2281, %v2197
        %v2284 = vsel %vm1674, %v2282, %v2203
        %v2285 = vsel %vm1674, %v2283, %v2205
        %v2286 = vsel %vm1677, %v2284, %v2211
        %v2287 = vsel %vm1677, %v2285, %v2213
        %v2288 = vsel %vm1680, %v2286, %v2219
        %v2289 = vsel %vm1680, %v2287, %v2221
        %v2290 = vsel %vm1683, %v2288, %v2227
        %v2291 = vsel %vm1683, %v2289, %v2229
        %v2292 = vsel %vm1686, %v2290, %v2235
        %v2293 = vsel %vm1686, %v2291, %v2237
        %v2294 = vsel %vm1689, %v2292, %v2243
        %v2295 = vsel %vm1689, %v2293, %v2245
        %v2296 = vsel %vm1692, %v2294, %v2251
        %v2297 = vsel %vm1692, %v2295, %v2253
        %v2298 = vsel %vm1695, %v2296, %v2259
        %v2299 = vsel %vm1695, %v2297, %v2261
        %v2300 = vsel %vm1698, %v2298, %v2267
        %v2301 = vsel %vm1698, %v2299, %v2269
        %2304 = vrot.lane.b32.xlu0 %v2300, 32
        %v2305 = vpop.permute.xlu0 %2304
        %2306 = vrot.lane.b32.xlu0 %v2301, 32
        %v2307 = vpop.permute.xlu0 %2306
        %vm2310 = vcmask 523520
        %2311 = vst.msk [vmem:[%s154] sm:$0xff] %vm2310, %v2305
        %2312 = vst.msk [vmem:[%s154 + $0x8] sm:$0xff] %vm2310, %v2307
        %s2313 = sand.u32 %s68, 1
        %s2314 = scalar_lea.sflag [#allocation4], %s2313
        %s2315 = sand.u32 %s68, 1
        %s2316 = smul.addr %s2315, 16
        %s2317 = scalar_lea.vmem [#allocation5], %s2316
        // Predicated region
        $region29: #{tpu_custom_call.1} parent=23 // pred_check
          %p2318 = pneg %p78
        $region30: #{tpu_custom_call.1} parent=23 // pred_check_branch
          %2320 = sbr.rel (%p2318) target = $region32
        $region31: #{tpu_custom_call.1} parent=23 // pred_region
          %2322 = vsyncadd %s2314, 0
          %s2323 = smul.addr %s23, 2
          %s2324 = smul.addr %s22, 2
          %s2325 = sadd.s32 %s2323, %s2324
          %s2326 = smul.addr %s2325, 8
          %s2327 = scalar_lea.hbm %s1, %s2326
          %s2328 = sshll.u32 %s2317, 4
          %s2329 = int_to_ptr.vmem [resolvable:$true] %s2328
          %s2330 = sshll.u32 %s2327, 4
          %s2331 = int_to_ptr.hbm [resolvable:$true] %s2330
          %2336 = dma.vmem_to_hbm [thread:$0]  %s2329, 256, %s2331, %s2314, 128, 128, 8
        $region32: #{tpu_custom_call.1} parent=23 // pred_fallthru
          _
      $region24: #{tpu_custom_call.1} parent=5 // pred_fallthru
        _
      %p2337 = scmp.le.s32.totalorder 2, %s13
      // Predicated region
      $region33: #{tpu_custom_call.1} parent=5 // pred_check
        %p2338 = pneg %p2337
      $region34: #{tpu_custom_call.1} parent=5 // pred_check_branch
        %2340 = sbr.rel (%p2338) target = $region36
      $region35: #{tpu_custom_call.1} parent=5 // pred_region
        %s2341 = ssub.s32 %s13, 2
        // Predicated region
        $region37: #{tpu_custom_call.1} parent=35 // pred_check
          %p2342 = pneg %p84
        $region38: #{tpu_custom_call.1} parent=35 // pred_check_branch
          %2344 = sbr.rel (%p2342) target = $region40
        $region39: #{tpu_custom_call.1} parent=35 // pred_region
          %s2345 = sand.u32 %s69, 1
          %s2346 = scalar_lea.sflag [#allocation4], %s2345
          %s2347 = sand.u32 %s69, 1
          %s2348 = smul.addr %s2347, 16
          %s2349 = scalar_lea.vmem [#allocation5], %s2348
          %2351 = dma.done %s2346, 256
        $region40: #{tpu_custom_call.1} parent=35 // pred_fallthru
          _
      $region36: #{tpu_custom_call.1} parent=5 // pred_fallthru
        _
    $region6: #{tpu_custom_call.1} parent=1 // loop_footer
      %s17 = sadd.s32 1, %s13
    $region7: #{tpu_custom_call.1} parent=1 // loop_footer_branch
      %12 = sbr.rel target = $region3
    $region8: #{tpu_custom_call.1} parent=1 // loop_exit
      _
    %2352 = vsyncpa [#allocation3], 1
    %s2353 = scalar_lea.sflag [#allocation3], 1
    %2354 = vsyncpa %s2353, 1
    %2355 = vsyncpa [#allocation4], 1
    %s2356 = scalar_lea.sflag [#allocation4], 1
    %2357 = vsyncpa %s2356, 1

</llo_original>
